<compile_context>
chip_gen: v6e
topology: v6e:2x2x1
jax: 0.10.0
libtpu: 0.0.40
codegen_flags: <defaults>
</compile_context>

<pallas_src>
import jax
import jax.numpy as jnp
from jax.experimental import pallas as pl
from jax.experimental.pallas import tpu as pltpu

LANE = 128      # channel dims padded to a multiple of this (lane-dense stores)
SUBLANE = 8     # row-tile granularity


# --------------------------- Pallas kernels ---------------------------------
# Full-K variants: the whole contraction is done in one MXU call per (i, j)
# grid step -- weights VMEM-resident, no accumulator scratch, no k grid axis.

def _mm_bias_relu_kernel(p_ref, w_ref, b_ref, o_ref):
    # out = relu(P @ W + bias)          (BN scale pre-folded into W)
    acc = jnp.dot(p_ref[...], w_ref[...], preferred_element_type=jnp.float32)
    o_ref[...] = jnp.maximum(acc + b_ref[...], 0.0).astype(o_ref.dtype)


def _mm_bias_add_relu_kernel(p_ref, w_ref, b_ref, r_ref, o_ref):
    # Identity shortcut: out = relu(P @ W + bias + residual); residual arrives
    # in bf16 (halved HBM traffic), the add is done in f32.
    acc = jnp.dot(p_ref[...], w_ref[...], preferred_element_type=jnp.float32)
    acc = acc + b_ref[...] + r_ref[...].astype(jnp.float32)
    o_ref[...] = jnp.maximum(acc, 0.0).astype(o_ref.dtype)


# K-tiled fallback variants (only when patches + weights do not fit the
# per-generation VMEM budget): f32 accumulator, pl.when init / epilogue,
# reduction (k) axis last and marked "arbitrary".

def _mm_bias_relu_ktiled_kernel(p_ref, w_ref, b_ref, o_ref, acc_ref):
    k = pl.program_id(2)

    @pl.when(k == 0)
    def _init():
        acc_ref[...] = jnp.zeros_like(acc_ref)

    acc_ref[...] += jnp.dot(p_ref[...], w_ref[...],
                            preferred_element_type=jnp.float32)

    @pl.when(k == pl.num_programs(2) - 1)
    def _epilogue():
        o_ref[...] = jnp.maximum(acc_ref[...] + b_ref[...],
                                 0.0).astype(o_ref.dtype)


def _mm_bias_add_relu_ktiled_kernel(p_ref, w_ref, b_ref, r_ref, o_ref, acc_ref):
    k = pl.program_id(2)

    @pl.when(k == 0)
    def _init():
        acc_ref[...] = jnp.zeros_like(acc_ref)

    acc_ref[...] += jnp.dot(p_ref[...], w_ref[...],
                            preferred_element_type=jnp.float32)

    @pl.when(k == pl.num_programs(2) - 1)
    def _epilogue():
        acc = acc_ref[...] + b_ref[...] + r_ref[...].astype(jnp.float32)
        o_ref[...] = jnp.maximum(acc, 0.0).astype(o_ref.dtype)


# --------------------------- pallas_call wrapper -----------------------------

def _round_up(x, m):
    return (x + m - 1) // m * m


def _pad_axis(a, axis, target):
    pad = target - a.shape[axis]
    if pad == 0:
        return a
    widths = [(0, 0)] * a.ndim
    widths[axis] = (0, pad)
    return jnp.pad(a, widths)


def _vmem_plan():
    """Per-generation scoped-VMEM limit and row-tile target.
    v5e / v6e (128 MiB physical VMEM): 96 MiB limit, tm = 512.
    v7x (64 MiB per TensorCore):       <= 48 MiB limit, tm = 256."""
    cap = 64 * 1024 * 1024
    try:
        cap = int(pltpu.get_tpu_info().vmem_capacity_bytes)
    except Exception:
        pass
    if cap >= 100 * 1024 * 1024:
        return 96 * 1024 * 1024, 512
    return min(48 * 1024 * 1024, (cap * 3) // 4), 256


def _choose_tk(tm, K, tn, resid_row_bytes, vmem_limit):
    """Prefer the full K (weights VMEM-resident, no accumulator, no k grid
    axis); fall back to the largest lane-aligned divisor of K that fits."""
    budget = int(vmem_limit * 0.7)          # pipeline / compiler headroom

    def footprint(tk, with_acc):
        fp = 2 * tm * tk * 2                # bf16 patches (double-buffered)
        fp += 2 * tk * tn * 2               # bf16 weights
        fp += 2 * tm * tn * 4               # f32 output tile
        fp += 2 * tm * resid_row_bytes      # bf16 residual (if any)
        fp += 2 * tn * 4                    # bias
        if with_acc:
            fp += tm * tn * 4               # f32 accumulator scratch
        return fp

    if footprint(K, False) <= budget:
        return K
    for tk in range(K - LANE, 0, -LANE):    # largest lane-multiple divisor
        if K % tk == 0 and footprint(tk, True) <= budget:
            return tk
    return LANE


def _fused_matmul(patches, w, bias, *, residual=None, out_dtype, tm, vmem_limit):
    """out = relu(patches @ w + bias [+ residual]); bf16 MXU inputs, f32 accum,
    BN scale already folded into w."""
    M, K = patches.shape
    cout_p = w.shape[1]
    m_tiles = M // tm

    # Column (cout) tiling so both v7x TensorCores get work when M is too small
    # for >= 2 row tiles (both grid axes are "parallel").
    tn = cout_p
    if m_tiles < 2 and cout_p % (2 * LANE) == 0:
        tn = cout_p // 2
    n_tiles = cout_p // tn

    resid_row_bytes = tn * 2 if residual is not None else 0
    tk = _choose_tk(tm, K, tn, resid_row_bytes, vmem_limit)

    args = [patches, w, bias]
    if tk == K:
        # Weights VMEM-resident: constant block index across M tiles.
        # TODO(synk): try pipeline_mode=pl.Buffered(3) on the patches spec once
        # per-step DMA is patches-only (hide DMA jitter on v6e).
        grid = (m_tiles, n_tiles)
        in_specs = [
            pl.BlockSpec((tm, K), lambda i, j: (i, 0)),
            pl.BlockSpec((K, tn), lambda i, j: (0, j)),
            pl.BlockSpec((1, tn), lambda i, j: (0, j)),
        ]
        out_specs = pl.BlockSpec((tm, tn), lambda i, j: (i, j))
        scratch = []
        dims = ("parallel", "parallel")
        if residual is not None:
            in_specs.append(pl.BlockSpec((tm, tn), lambda i, j: (i, j)))
            args.append(residual)
            kernel = _mm_bias_add_relu_kernel
        else:
            kernel = _mm_bias_relu_kernel
    else:
        grid = (m_tiles, n_tiles, K // tk)
        in_specs = [
            pl.BlockSpec((tm, tk), lambda i, j, k: (i, k)),
            pl.BlockSpec((tk, tn), lambda i, j, k: (k, j)),
            pl.BlockSpec((1, tn), lambda i, j, k: (0, j)),
        ]
        out_specs = pl.BlockSpec((tm, tn), lambda i, j, k: (i, j))
        scratch = [pltpu.VMEM((tm, tn), jnp.float32)]
        dims = ("parallel", "parallel", "arbitrary")
        if residual is not None:
            in_specs.append(pl.BlockSpec((tm, tn), lambda i, j, k: (i, j)))
            args.append(residual)
            kernel = _mm_bias_add_relu_ktiled_kernel
        else:
            kernel = _mm_bias_relu_ktiled_kernel

    # Advisory cost: patches read once; weights once when resident, once per
    # M tile when the K axis is tiled (per review feedback).
    w_fetches = 1 if tk == K else m_tiles
    bytes_accessed = (
        M * K * 2
        + w_fetches * K * cout_p * 2
        + cout_p * 4
        + (M * cout_p * 2 if residual is not None else 0)
        + M * cout_p * jnp.dtype(out_dtype).itemsize)
    flops = 2 * M * K * cout_p

    return pl.pallas_call(
        kernel,
        out_shape=jax.ShapeDtypeStruct((M, cout_p), out_dtype),
        grid_spec=pltpu.PrefetchScalarGridSpec(
            num_scalar_prefetch=0,
            grid=grid,
            in_specs=in_specs,
            out_specs=out_specs,
            scratch_shapes=scratch,
        ),
        compiler_params=pltpu.CompilerParams(
            dimension_semantics=dims,
            vmem_limit_bytes=int(vmem_limit),
        ),
        cost_estimate=pl.CostEstimate(
            flops=int(flops), transcendentals=0,
            bytes_accessed=int(bytes_accessed)),
    )(*args)


# ------------------------------ glue (JAX) ----------------------------------

def _im2col(x_nhwc, ksize, stride, pad):
    """(N,H,W,C) -> (N*Ho*Wo, ksize*ksize*C) patches, feature order (dy,dx,c)."""
    N, H, W, C = x_nhwc.shape
    xp = jnp.pad(x_nhwc, ((0, 0), (pad, pad), (pad, pad), (0, 0)))
    Ho = (H + 2 * pad - ksize) // stride + 1
    Wo = (W + 2 * pad - ksize) // stride + 1
    cols = []
    for dy in range(ksize):
        for dx in range(ksize):
            cols.append(xp[:, dy:dy + stride * Ho:stride,
                           dx:dx + stride * Wo:stride, :])
    patches = jnp.concatenate(cols, axis=-1)
    return patches.reshape(N * Ho * Wo, ksize * ksize * C), Ho, Wo


def _fold_bn(bn, cout_p, eps=1e-5):
    """Inference BN -> per-channel (scale, bias), zero-padded to cout_p lanes."""
    gamma, beta, mean, var = bn
    scale = gamma / jnp.sqrt(var + eps)
    bias = beta - mean * scale
    scale = _pad_axis(scale, 0, cout_p).reshape(1, cout_p).astype(jnp.float32)
    bias = _pad_axis(bias, 0, cout_p).reshape(1, cout_p).astype(jnp.float32)
    return scale, bias


def _prep_conv_weight(w_flat, ksize, cin, cin_p, cout, cout_p, scale_row):
    """(k*k*cin, cout) -> channel-padded (k*k*cin_p, cout_p) bf16 with the BN
    scale folded in (f32 multiply before the bf16 cast)."""
    w = w_flat.reshape(ksize, ksize, cin, cout)
    w = _pad_axis(_pad_axis(w, 2, cin_p), 3, cout_p)
    w = w.reshape(ksize * ksize * cin_p, cout_p) * scale_row
    return w.astype(jnp.bfloat16)


def basic_block_forward(x_nchw, params, stride):
    x = jnp.transpose(x_nchw, (0, 2, 3, 1)).astype(jnp.float32)   # NCHW -> NHWC
    N, H, W, Cin = x.shape
    Cout = params["w1"].shape[1]
    cin_p = _round_up(Cin, LANE)
    cout_p = _round_up(Cout, LANE)
    vmem_limit, tm_target = _vmem_plan()

    xp = _pad_axis(x, 3, cin_p).astype(jnp.bfloat16)   # lane-dense bf16 activations

    s1, b1 = _fold_bn(params["bn1"], cout_p)
    s2, b2 = _fold_bn(params["bn2"], cout_p)
    w1 = _prep_conv_weight(params["w1"], 3, Cin, cin_p, Cout, cout_p, s1)
    w2 = _prep_conv_weight(params["w2"], 3, Cout, cout_p, Cout, cout_p, s2)

    # conv1 (3x3, stride=s, pad=1) + bn1 + relu  ->  bf16 out1
    p1, Ho, Wo = _im2col(xp, 3, stride, 1)
    M = N * Ho * Wo
    tm = min(tm_target, _round_up(M, SUBLANE))
    Mp = _round_up(M, tm)
    p1 = _pad_axis(p1, 0, Mp)
    out1 = _fused_matmul(p1, w1, b1, out_dtype=jnp.bfloat16, tm=tm,
                         vmem_limit=vmem_limit)
    out1 = out1[:M].reshape(N, Ho, Wo, cout_p)

    # conv2 (3x3, stride=1, pad=1) + bn2 (+ shortcut) + relu
    p2, _, _ = _im2col(out1, 3, 1, 1)
    p2 = _pad_axis(p2, 0, Mp)

    if params["ws"] is not None:
        # Projection shortcut folded into the main matmul's K axis:
        #   [patches | x_s] @ [[W2*s2]; [Ws*ss]] + (b2 + bs)
        ss, bs = _fold_bn(params["bns"], cout_p)
        ws = _pad_axis(_pad_axis(params["ws"], 0, cin_p), 1, cout_p) * ss
        ws = ws.astype(jnp.bfloat16)
        sx = xp[:, ::stride, ::stride, :].reshape(M, cin_p)
        sx = _pad_axis(sx, 0, Mp)
        out = _fused_matmul(jnp.concatenate([p2, sx], axis=1),
                            jnp.concatenate([w2, ws], axis=0),
                            b2 + bs, out_dtype=jnp.float32, tm=tm,
                            vmem_limit=vmem_limit)
    else:
        # Identity shortcut: bf16 residual streamed into the kernel, f32 add.
        sx = _pad_axis(xp.reshape(M, cin_p), 0, Mp)      # cin_p == cout_p here
        out = _fused_matmul(p2, w2, b2, residual=sx, out_dtype=jnp.float32,
                            tm=tm, vmem_limit=vmem_limit)

    out = out[:M, :Cout].reshape(N, Ho, Wo, Cout)
    return jnp.transpose(out, (0, 3, 1, 2))              # NHWC -> NCHW


# --------------------------- pure-JAX reference ------------------------------

def ref_forward(x_nchw, params, stride, compute_dtype=jnp.float32):
    """Reference BasicBlock.  compute_dtype=bfloat16 mirrors the kernel's
    rounding points exactly (BN scale folded into bf16 weights, bf16 matmul
    inputs, f32 accumulation / bias / ReLU)."""
    x = jnp.transpose(x_nchw, (0, 2, 3, 1)).astype(jnp.float32)
    rd = lambda a: a.astype(compute_dtype).astype(jnp.float32)

    def conv_bn(inp, w_flat, bn_p, k, s, pad):
        gamma, beta, mean, var = bn_p
        scale = gamma / jnp.sqrt(var + 1e-5)
        bias = beta - mean * scale
        cin = inp.shape[-1]
        w = rd(w_flat * scale[None, :]).reshape(k, k, cin, -1)
        out = jax.lax.conv_general_dilated(
            rd(inp), w, window_strides=(s, s), padding=((pad, pad), (pad, pad)),
            dimension_numbers=("NHWC", "HWIO", "NHWC"))
        return out + bias

    out = jax.nn.relu(conv_bn(x, params["w1"], params["bn1"], 3, stride, 1))
    out = conv_bn(out, params["w2"], params["bn2"], 3, 1, 1)
    if params["ws"] is not None:
        sc = conv_bn(x, params["ws"], params["bns"], 1, stride, 0)
    else:
        sc = rd(x)
    return jnp.transpose(jax.nn.relu(out + sc), (0, 3, 1, 2))


# ------------------------------ parameter init -------------------------------

def init_params(key, in_channels, out_channels, stride):
    ks = jax.random.split(key, 12)

    def bn_params(k0, k1, k2, k3, c):
        gamma = jax.random.uniform(k0, (c,), jnp.float32, 0.5, 1.5)
        beta = 0.1 * jax.random.normal(k1, (c,), jnp.float32)
        mean = 0.1 * jax.random.normal(k2, (c,), jnp.float32)
        var = jax.random.uniform(k3, (c,), jnp.float32, 0.5, 1.5)
        return (gamma, beta, mean, var)

    w1 = 0.1 * jax.random.normal(ks[0], (3 * 3 * in_channels, out_channels), jnp.float32)
    w2 = 0.1 * jax.random.normal(ks[1], (3 * 3 * out_channels, out_channels), jnp.float32)
    params = {
        "w1": w1, "bn1": bn_params(ks[2], ks[3], ks[4], ks[5], out_channels),
        "w2": w2, "bn2": bn_params(ks[6], ks[7], ks[8], ks[9], out_channels),
        "ws": None, "bns": None,
    }
    if stride != 1 or in_channels != out_channels:
        params["ws"] = 0.1 * jax.random.normal(ks[10], (in_channels, out_channels), jnp.float32)
        params["bns"] = bn_params(*jax.random.split(ks[11], 4), out_channels)
    return params


# ---------------------------------- main -------------------------------------

if __name__ == "__main__":
    key = jax.random.PRNGKey(0)
    fwd = jax.jit(basic_block_forward, static_argnums=2)

    configs = [
        # (N, Cin, H, W, Cout, stride)
        (2, 4, 16, 16, 8, 2),   # projection shortcut, folded into the K axis
        (2, 8, 16, 16, 8, 1),   # identity shortcut, fused bf16 residual add
    ]
    for idx, (N, Cin, H, W, Cout, stride) in enumerate(configs):
        k_x, k_p = jax.random.split(jax.random.fold_in(key, idx))
        x = jax.random.normal(k_x, (N, Cin, H, W), jnp.float32)
        params = init_params(k_p, Cin, Cout, stride)

        out = jax.block_until_ready(fwd(x, params, stride))

        Ho = (H + 2 - 3) // stride + 1
        Wo = (W + 2 - 3) // stride + 1
        assert out.shape == (N, Cout, Ho, Wo), out.shape

        # Tight check vs a reference that mirrors the kernel's bf16 rounding.
        ref_t = jax.block_until_ready(ref_forward(x, params, stride, jnp.bfloat16))
        err_t = float(jnp.max(jnp.abs(out - ref_t)))
        assert jnp.allclose(out, ref_t, atol=5e-3, rtol=5e-3), \
            f"mismatch vs bf16-mirrored reference (config {idx}), max abs err {err_t}"

        # Loose sanity check vs the full-f32 reference (pure spec semantics).
        ref_f = jax.block_until_ready(ref_forward(x, params, stride, jnp.float32))
        err_f = float(jnp.max(jnp.abs(out - ref_f)))
        assert jnp.allclose(out, ref_f, atol=5e-2, rtol=5e-2), \
            f"mismatch vs f32 reference (config {idx}), max abs err {err_f}"

    print("KERNEL_OK")
</pallas_src>

<mosaic_0001>
module attributes {stable_mosaic.version = 11 : i64} {
  func.func @_mm_bias_relu_kernel(%arg0: i32, %arg1: i32, %arg2: memref<128x1152xbf16, #tpu.memory_space<vmem>>, %arg3: memref<1152x128xbf16, #tpu.memory_space<vmem>>, %arg4: memref<1x128xf32, #tpu.memory_space<vmem>>, %arg5: memref<128x128xbf16, #tpu.memory_space<vmem>>) attributes {dimension_semantics = [#tpu.dimension_semantics<parallel>, #tpu.dimension_semantics<parallel>], iteration_bounds = array<i64: 1, 1>, scalar_prefetch = 0 : i64, scratch_operands = 0 : i64, tpu.core_type = #tpu.core_type<tc>, window_params = [{transform_indices = @transform_0, window_bounds = array<i64: 128, 1152>}, {transform_indices = @transform_1, window_bounds = array<i64: 1152, 128>}, {transform_indices = @transform_2, window_bounds = array<i64: 1, 128>}, {transform_indices = @transform_3, window_bounds = array<i64: 128, 128>}]} {
    %c0 = arith.constant 0 : index
    %c0_0 = arith.constant 0 : index
    %0 = vector.load %arg2[%c0, %c0_0] : memref<128x1152xbf16, #tpu.memory_space<vmem>>, vector<128x1152xbf16>
    %c0_1 = arith.constant 0 : index
    %c0_2 = arith.constant 0 : index
    %1 = vector.load %arg3[%c0_1, %c0_2] : memref<1152x128xbf16, #tpu.memory_space<vmem>>, vector<1152x128xbf16>
    %cst = arith.constant dense<0.000000e+00> : vector<128x128xf32>
    %2 = tpu.matmul %0, %1, %cst {dimension_numbers = #tpu.dot_dimension_numbers<[1], [0], [0], [1], [0, 0, 1, 1], [], []>} : vector<128x1152xbf16>, vector<1152x128xbf16>, vector<128x128xf32> -> vector<128x128xf32>
    %c0_3 = arith.constant 0 : index
    %c0_4 = arith.constant 0 : index
    %3 = vector.load %arg4[%c0_3, %c0_4] : memref<1x128xf32, #tpu.memory_space<vmem>>, vector<1x128xf32>
    %4 = vector.broadcast %3 : vector<1x128xf32> to vector<128x128xf32>
    %5 = arith.addf %2, %4 : vector<128x128xf32>
    %cst_5 = arith.constant 0.000000e+00 : f32
    %6 = vector.broadcast %cst_5 : f32 to vector<128x128xf32>
    %7 = arith.maximumf %5, %6 : vector<128x128xf32>
    %8 = arith.truncf %7 : vector<128x128xf32> to vector<128x128xbf16>
    %c0_6 = arith.constant 0 : index
    %c0_7 = arith.constant 0 : index
    %9 = vector.load %arg5[%c0_6, %c0_7] : memref<128x128xbf16, #tpu.memory_space<vmem>>, vector<128x128xbf16>
    tpu.vector_store %arg5[%c0_6, %c0_7], %8 {strides = array<i32>} : memref<128x128xbf16, #tpu.memory_space<vmem>>, vector<128x128xbf16>,
    return
  }
  func.func @transform_0(%arg0: i32, %arg1: i32) -> (i32, i32) {
    %c0_i32 = arith.constant 0 : i32
    %c0_i32_0 = arith.constant 0 : i32
    return %arg0, %c0_i32 : i32, i32
  }
  func.func @transform_1(%arg0: i32, %arg1: i32) -> (i32, i32) {
    %c0_i32 = arith.constant 0 : i32
    %c0_i32_0 = arith.constant 0 : i32
    return %c0_i32, %arg1 : i32, i32
  }
  func.func @transform_2(%arg0: i32, %arg1: i32) -> (i32, i32) {
    %c0_i32 = arith.constant 0 : i32
    %c0_i32_0 = arith.constant 0 : i32
    return %c0_i32, %arg1 : i32, i32
  }
  func.func @transform_3(%arg0: i32, %arg1: i32) -> (i32, i32) {
    %c0_i32 = arith.constant 0 : i32
    return %arg0, %arg1 : i32, i32
  }
}

module attributes {stable_mosaic.version = 11 : i64} {
  func.func @_mm_bias_relu_kernel(%arg0: i32, %arg1: i32, %arg2: memref<128x1280xbf16, #tpu.memory_space<vmem>>, %arg3: memref<1280x128xbf16, #tpu.memory_space<vmem>>, %arg4: memref<1x128xf32, #tpu.memory_space<vmem>>, %arg5: memref<128x128xf32, #tpu.memory_space<vmem>>) attributes {dimension_semantics = [#tpu.dimension_semantics<parallel>, #tpu.dimension_semantics<parallel>], iteration_bounds = array<i64: 1, 1>, scalar_prefetch = 0 : i64, scratch_operands = 0 : i64, tpu.core_type = #tpu.core_type<tc>, window_params = [{transform_indices = @transform_0, window_bounds = array<i64: 128, 1280>}, {transform_indices = @transform_1, window_bounds = array<i64: 1280, 128>}, {transform_indices = @transform_2, window_bounds = array<i64: 1, 128>}, {transform_indices = @transform_3, window_bounds = array<i64: 128, 128>}]} {
    %c0 = arith.constant 0 : index
    %c0_0 = arith.constant 0 : index
    %0 = vector.load %arg2[%c0, %c0_0] : memref<128x1280xbf16, #tpu.memory_space<vmem>>, vector<128x1280xbf16>
    %c0_1 = arith.constant 0 : index
    %c0_2 = arith.constant 0 : index
    %1 = vector.load %arg3[%c0_1, %c0_2] : memref<1280x128xbf16, #tpu.memory_space<vmem>>, vector<1280x128xbf16>
    %cst = arith.constant dense<0.000000e+00> : vector<128x128xf32>
    %2 = tpu.matmul %0, %1, %cst {dimension_numbers = #tpu.dot_dimension_numbers<[1], [0], [0], [1], [0, 0, 1, 1], [], []>} : vector<128x1280xbf16>, vector<1280x128xbf16>, vector<128x128xf32> -> vector<128x128xf32>
    %c0_3 = arith.constant 0 : index
    %c0_4 = arith.constant 0 : index
    %3 = vector.load %arg4[%c0_3, %c0_4] : memref<1x128xf32, #tpu.memory_space<vmem>>, vector<1x128xf32>
    %4 = vector.broadcast %3 : vector<1x128xf32> to vector<128x128xf32>
    %5 = arith.addf %2, %4 : vector<128x128xf32>
    %cst_5 = arith.constant 0.000000e+00 : f32
    %6 = vector.broadcast %cst_5 : f32 to vector<128x128xf32>
    %7 = arith.maximumf %5, %6 : vector<128x128xf32>
    %c0_6 = arith.constant 0 : index
    %c0_7 = arith.constant 0 : index
    %8 = vector.load %arg5[%c0_6, %c0_7] : memref<128x128xf32, #tpu.memory_space<vmem>>, vector<128x128xf32>
    tpu.vector_store %arg5[%c0_6, %c0_7], %7 {strides = array<i32>} : memref<128x128xf32, #tpu.memory_space<vmem>>, vector<128x128xf32>,
    return
  }
  func.func @transform_0(%arg0: i32, %arg1: i32) -> (i32, i32) {
    %c0_i32 = arith.constant 0 : i32
    %c0_i32_0 = arith.constant 0 : i32
    return %arg0, %c0_i32 : i32, i32
  }
  func.func @transform_1(%arg0: i32, %arg1: i32) -> (i32, i32) {
    %c0_i32 = arith.constant 0 : i32
    %c0_i32_0 = arith.constant 0 : i32
    return %c0_i32, %arg1 : i32, i32
  }
  func.func @transform_2(%arg0: i32, %arg1: i32) -> (i32, i32) {
    %c0_i32 = arith.constant 0 : i32
    %c0_i32_0 = arith.constant 0 : i32
    return %c0_i32, %arg1 : i32, i32
  }
  func.func @transform_3(%arg0: i32, %arg1: i32) -> (i32, i32) {
    %c0_i32 = arith.constant 0 : i32
    return %arg0, %arg1 : i32, i32
  }
}

</mosaic_0001>

<llo_original>
// kernel: basic_block_forward.2
$region0: #{basic_block_forward.2}
  #allocation0 [shape = 'u32[]', space=smem, size = 0x4, offset = 0x4, fixed_abs, tag = 'smem constant byte address 0x4 - core index']
  #allocation1 [shape = 'u32[144,128]{1,0:T(1,128)}', space=vmem, size = 0x12000, scoped, tag = 'internal scratch']
  %s0 = inlined_call_operand.vmem [shape: bf16[128,1152], index: 0, kind: input, shape index: {}]
  %s1 = inlined_call_operand.vmem [shape: bf16[1152,128], index: 1, kind: input, shape index: {}]
  %s2 = inlined_call_operand.vmem [shape: f32[1,128], index: 2, kind: input, shape index: {}]
  %s3 = inlined_call_operand.vmem [shape: bf16[128,128], index: 3, kind: output, shape index: {}]
  %s4 = sld [smem:[#allocation0]]
  $region22: #{basic_block_forward.2} parent=0
    _
  %s6 = ssub.s32 1, %s4
  %s7 = scalar_select 0, %s6, %s4
  // Predicated region
  $region2: #{basic_block_forward.2} parent=0 // pred_check
    _
  $region3: #{basic_block_forward.2} parent=0 // pred_check_branch
    %9 = sbr.rel (0) target = $region5
  $region4: #{basic_block_forward.2} parent=0 // pred_region
    _
  $region5: #{basic_block_forward.2} parent=0 // pred_fallthru
    _
  // Predicated region
  $region6: #{basic_block_forward.2} parent=0 // pred_check
    _
  $region7: #{basic_block_forward.2} parent=0 // pred_check_branch
    %11 = sbr.rel (0) target = $region9
  $region8: #{basic_block_forward.2} parent=0 // pred_region
    _
  $region9: #{basic_block_forward.2} parent=0 // pred_fallthru
    _
  // Predicated region
  $region10: #{basic_block_forward.2} parent=0 // pred_check
    _
  $region11: #{basic_block_forward.2} parent=0 // pred_check_branch
    %13 = sbr.rel (0) target = $region13
  $region12: #{basic_block_forward.2} parent=0 // pred_region
    _
  $region13: #{basic_block_forward.2} parent=0 // pred_fallthru
    _
  %v15 = vld [vmem:[%s0] sm:$0xff]
  %v16 = vld [vmem:[%s0 + $0x8] sm:$0xff]
  %v17 = vld [vmem:[%s0 + $0x10] sm:$0xff]
  %v18 = vld [vmem:[%s0 + $0x18] sm:$0xff]
  %v19 = vld [vmem:[%s0 + $0x20] sm:$0xf]
  %v20 = vld [vmem:[%s0 + $0x24] sm:$0xff]
  %v21 = vld [vmem:[%s0 + $0x2c] sm:$0xff]
  %v22 = vld [vmem:[%s0 + $0x34] sm:$0xff]
  %v23 = vld [vmem:[%s0 + $0x3c] sm:$0xff]
  %v24 = vld [vmem:[%s0 + $0x44] sm:$0xf]
  %v25 = vld [vmem:[%s0 + $0x48] sm:$0xff]
  %v26 = vld [vmem:[%s0 + $0x50] sm:$0xff]
  %v27 = vld [vmem:[%s0 + $0x58] sm:$0xff]
  %v28 = vld [vmem:[%s0 + $0x60] sm:$0xff]
  %v29 = vld [vmem:[%s0 + $0x68] sm:$0xf]
  %v30 = vld [vmem:[%s0 + $0x6c] sm:$0xff]
  %v31 = vld [vmem:[%s0 + $0x74] sm:$0xff]
  %v32 = vld [vmem:[%s0 + $0x7c] sm:$0xff]
  %v33 = vld [vmem:[%s0 + $0x84] sm:$0xff]
  %v34 = vld [vmem:[%s0 + $0x8c] sm:$0xf]
  %v35 = vld [vmem:[%s0 + $0x90] sm:$0xff]
  %v36 = vld [vmem:[%s0 + $0x98] sm:$0xff]
  %v37 = vld [vmem:[%s0 + $0xa0] sm:$0xff]
  %v38 = vld [vmem:[%s0 + $0xa8] sm:$0xff]
  %v39 = vld [vmem:[%s0 + $0xb0] sm:$0xf]
  %v40 = vld [vmem:[%s0 + $0xb4] sm:$0xff]
  %v41 = vld [vmem:[%s0 + $0xbc] sm:$0xff]
  %v42 = vld [vmem:[%s0 + $0xc4] sm:$0xff]
  %v43 = vld [vmem:[%s0 + $0xcc] sm:$0xff]
  %v44 = vld [vmem:[%s0 + $0xd4] sm:$0xf]
  %v45 = vld [vmem:[%s0 + $0xd8] sm:$0xff]
  %v46 = vld [vmem:[%s0 + $0xe0] sm:$0xff]
  %v47 = vld [vmem:[%s0 + $0xe8] sm:$0xff]
  %v48 = vld [vmem:[%s0 + $0xf0] sm:$0xff]
  %v49 = vld [vmem:[%s0 + $0xf8] sm:$0xf]
  %v50 = vld [vmem:[%s0 + $0xfc] sm:$0xff]
  %v51 = vld [vmem:[%s0 + $0x104] sm:$0xff]
  %v52 = vld [vmem:[%s0 + $0x10c] sm:$0xff]
  %v53 = vld [vmem:[%s0 + $0x114] sm:$0xff]
  %v54 = vld [vmem:[%s0 + $0x11c] sm:$0xf]
  %v55 = vld [vmem:[%s0 + $0x120] sm:$0xff]
  %v56 = vld [vmem:[%s0 + $0x128] sm:$0xff]
  %v57 = vld [vmem:[%s0 + $0x130] sm:$0xff]
  %v58 = vld [vmem:[%s0 + $0x138] sm:$0xff]
  %v59 = vld [vmem:[%s0 + $0x140] sm:$0xf]
  %v60 = vld [vmem:[%s0 + $0x144] sm:$0xff]
  %v61 = vld [vmem:[%s0 + $0x14c] sm:$0xff]
  %v62 = vld [vmem:[%s0 + $0x154] sm:$0xff]
  %v63 = vld [vmem:[%s0 + $0x15c] sm:$0xff]
  %v64 = vld [vmem:[%s0 + $0x164] sm:$0xf]
  %v65 = vld [vmem:[%s0 + $0x168] sm:$0xff]
  %v66 = vld [vmem:[%s0 + $0x170] sm:$0xff]
  %v67 = vld [vmem:[%s0 + $0x178] sm:$0xff]
  %v68 = vld [vmem:[%s0 + $0x180] sm:$0xff]
  %v69 = vld [vmem:[%s0 + $0x188] sm:$0xf]
  %v70 = vld [vmem:[%s0 + $0x18c] sm:$0xff]
  %v71 = vld [vmem:[%s0 + $0x194] sm:$0xff]
  %v72 = vld [vmem:[%s0 + $0x19c] sm:$0xff]
  %v73 = vld [vmem:[%s0 + $0x1a4] sm:$0xff]
  %v74 = vld [vmem:[%s0 + $0x1ac] sm:$0xf]
  %v75 = vld [vmem:[%s0 + $0x1b0] sm:$0xff]
  %v76 = vld [vmem:[%s0 + $0x1b8] sm:$0xff]
  %v77 = vld [vmem:[%s0 + $0x1c0] sm:$0xff]
  %v78 = vld [vmem:[%s0 + $0x1c8] sm:$0xff]
  %v79 = vld [vmem:[%s0 + $0x1d0] sm:$0xf]
  %v80 = vld [vmem:[%s0 + $0x1d4] sm:$0xff]
  %v81 = vld [vmem:[%s0 + $0x1dc] sm:$0xff]
  %v82 = vld [vmem:[%s0 + $0x1e4] sm:$0xff]
  %v83 = vld [vmem:[%s0 + $0x1ec] sm:$0xff]
  %v84 = vld [vmem:[%s0 + $0x1f4] sm:$0xf]
  %v85 = vld [vmem:[%s0 + $0x1f8] sm:$0xff]
  %v86 = vld [vmem:[%s0 + $0x200] sm:$0xff]
  %v87 = vld [vmem:[%s0 + $0x208] sm:$0xff]
  %v88 = vld [vmem:[%s0 + $0x210] sm:$0xff]
  %v89 = vld [vmem:[%s0 + $0x218] sm:$0xf]
  %v90 = vld [vmem:[%s0 + $0x21c] sm:$0xff]
  %v91 = vld [vmem:[%s0 + $0x224] sm:$0xff]
  %v92 = vld [vmem:[%s0 + $0x22c] sm:$0xff]
  %v93 = vld [vmem:[%s0 + $0x234] sm:$0xff]
  %v94 = vld [vmem:[%s0 + $0x23c] sm:$0xf]
  %v95 = vld [vmem:[%s1] sm:$0xf]
  %v96 = vld [vmem:[%s1 + $0x4] sm:$0xf]
  %v97 = vld [vmem:[%s1 + $0x8] sm:$0xf]
  %v98 = vld [vmem:[%s1 + $0xc] sm:$0xf]
  %v99 = vld [vmem:[%s1 + $0x10] sm:$0xf]
  %v100 = vld [vmem:[%s1 + $0x14] sm:$0xf]
  %v101 = vld [vmem:[%s1 + $0x18] sm:$0xf]
  %v102 = vld [vmem:[%s1 + $0x1c] sm:$0xf]
  %v103 = vld [vmem:[%s1 + $0x20] sm:$0xf]
  %v104 = vld [vmem:[%s1 + $0x24] sm:$0xf]
  %v105 = vld [vmem:[%s1 + $0x28] sm:$0xf]
  %v106 = vld [vmem:[%s1 + $0x2c] sm:$0xf]
  %v107 = vld [vmem:[%s1 + $0x30] sm:$0xf]
  %v108 = vld [vmem:[%s1 + $0x34] sm:$0xf]
  %v109 = vld [vmem:[%s1 + $0x38] sm:$0xf]
  %v110 = vld [vmem:[%s1 + $0x3c] sm:$0xf]
  %v111 = vld [vmem:[%s1 + $0x40] sm:$0xf]
  %v112 = vld [vmem:[%s1 + $0x44] sm:$0xf]
  %v113 = vld [vmem:[%s1 + $0x48] sm:$0xf]
  %v114 = vld [vmem:[%s1 + $0x4c] sm:$0xf]
  %v115 = vld [vmem:[%s1 + $0x50] sm:$0xf]
  %v116 = vld [vmem:[%s1 + $0x54] sm:$0xf]
  %v117 = vld [vmem:[%s1 + $0x58] sm:$0xf]
  %v118 = vld [vmem:[%s1 + $0x5c] sm:$0xf]
  %v119 = vld [vmem:[%s1 + $0x60] sm:$0xf]
  %v120 = vld [vmem:[%s1 + $0x64] sm:$0xf]
  %v121 = vld [vmem:[%s1 + $0x68] sm:$0xf]
  %v122 = vld [vmem:[%s1 + $0x6c] sm:$0xf]
  %v123 = vld [vmem:[%s1 + $0x70] sm:$0xf]
  %v124 = vld [vmem:[%s1 + $0x74] sm:$0xf]
  %v125 = vld [vmem:[%s1 + $0x78] sm:$0xf]
  %v126 = vld [vmem:[%s1 + $0x7c] sm:$0xf]
  %v127 = vld [vmem:[%s1 + $0x80] sm:$0xf]
  %v128 = vld [vmem:[%s1 + $0x84] sm:$0xf]
  %v129 = vld [vmem:[%s1 + $0x88] sm:$0xf]
  %v130 = vld [vmem:[%s1 + $0x8c] sm:$0xf]
  %v131 = vld [vmem:[%s1 + $0x90] sm:$0xf]
  %v132 = vld [vmem:[%s1 + $0x94] sm:$0xf]
  %v133 = vld [vmem:[%s1 + $0x98] sm:$0xf]
  %v134 = vld [vmem:[%s1 + $0x9c] sm:$0xf]
  %v135 = vld [vmem:[%s1 + $0xa0] sm:$0xf]
  %v136 = vld [vmem:[%s1 + $0xa4] sm:$0xf]
  %v137 = vld [vmem:[%s1 + $0xa8] sm:$0xf]
  %v138 = vld [vmem:[%s1 + $0xac] sm:$0xf]
  %v139 = vld [vmem:[%s1 + $0xb0] sm:$0xf]
  %v140 = vld [vmem:[%s1 + $0xb4] sm:$0xf]
  %v141 = vld [vmem:[%s1 + $0xb8] sm:$0xf]
  %v142 = vld [vmem:[%s1 + $0xbc] sm:$0xf]
  %v143 = vld [vmem:[%s1 + $0xc0] sm:$0xf]
  %v144 = vld [vmem:[%s1 + $0xc4] sm:$0xf]
  %v145 = vld [vmem:[%s1 + $0xc8] sm:$0xf]
  %v146 = vld [vmem:[%s1 + $0xcc] sm:$0xf]
  %v147 = vld [vmem:[%s1 + $0xd0] sm:$0xf]
  %v148 = vld [vmem:[%s1 + $0xd4] sm:$0xf]
  %v149 = vld [vmem:[%s1 + $0xd8] sm:$0xf]
  %v150 = vld [vmem:[%s1 + $0xdc] sm:$0xf]
  %v151 = vld [vmem:[%s1 + $0xe0] sm:$0xf]
  %v152 = vld [vmem:[%s1 + $0xe4] sm:$0xf]
  %v153 = vld [vmem:[%s1 + $0xe8] sm:$0xf]
  %v154 = vld [vmem:[%s1 + $0xec] sm:$0xf]
  %v155 = vld [vmem:[%s1 + $0xf0] sm:$0xf]
  %v156 = vld [vmem:[%s1 + $0xf4] sm:$0xf]
  %v157 = vld [vmem:[%s1 + $0xf8] sm:$0xf]
  %v158 = vld [vmem:[%s1 + $0xfc] sm:$0xf]
  %v159 = vld [vmem:[%s1 + $0x100] sm:$0xf]
  %v160 = vld [vmem:[%s1 + $0x104] sm:$0xf]
  %v161 = vld [vmem:[%s1 + $0x108] sm:$0xf]
  %v162 = vld [vmem:[%s1 + $0x10c] sm:$0xf]
  %v163 = vld [vmem:[%s1 + $0x110] sm:$0xf]
  %v164 = vld [vmem:[%s1 + $0x114] sm:$0xf]
  %v165 = vld [vmem:[%s1 + $0x118] sm:$0xf]
  %v166 = vld [vmem:[%s1 + $0x11c] sm:$0xf]
  %v167 = vld [vmem:[%s1 + $0x120] sm:$0xf]
  %v168 = vld [vmem:[%s1 + $0x124] sm:$0xf]
  %v169 = vld [vmem:[%s1 + $0x128] sm:$0xf]
  %v170 = vld [vmem:[%s1 + $0x12c] sm:$0xf]
  %v171 = vld [vmem:[%s1 + $0x130] sm:$0xf]
  %v172 = vld [vmem:[%s1 + $0x134] sm:$0xf]
  %v173 = vld [vmem:[%s1 + $0x138] sm:$0xf]
  %v174 = vld [vmem:[%s1 + $0x13c] sm:$0xf]
  %v175 = vld [vmem:[%s1 + $0x140] sm:$0xf]
  %v176 = vld [vmem:[%s1 + $0x144] sm:$0xf]
  %v177 = vld [vmem:[%s1 + $0x148] sm:$0xf]
  %v178 = vld [vmem:[%s1 + $0x14c] sm:$0xf]
  %v179 = vld [vmem:[%s1 + $0x150] sm:$0xf]
  %v180 = vld [vmem:[%s1 + $0x154] sm:$0xf]
  %v181 = vld [vmem:[%s1 + $0x158] sm:$0xf]
  %v182 = vld [vmem:[%s1 + $0x15c] sm:$0xf]
  %v183 = vld [vmem:[%s1 + $0x160] sm:$0xf]
  %v184 = vld [vmem:[%s1 + $0x164] sm:$0xf]
  %v185 = vld [vmem:[%s1 + $0x168] sm:$0xf]
  %v186 = vld [vmem:[%s1 + $0x16c] sm:$0xf]
  %v187 = vld [vmem:[%s1 + $0x170] sm:$0xf]
  %v188 = vld [vmem:[%s1 + $0x174] sm:$0xf]
  %v189 = vld [vmem:[%s1 + $0x178] sm:$0xf]
  %v190 = vld [vmem:[%s1 + $0x17c] sm:$0xf]
  %v191 = vld [vmem:[%s1 + $0x180] sm:$0xf]
  %v192 = vld [vmem:[%s1 + $0x184] sm:$0xf]
  %v193 = vld [vmem:[%s1 + $0x188] sm:$0xf]
  %v194 = vld [vmem:[%s1 + $0x18c] sm:$0xf]
  %v195 = vld [vmem:[%s1 + $0x190] sm:$0xf]
  %v196 = vld [vmem:[%s1 + $0x194] sm:$0xf]
  %v197 = vld [vmem:[%s1 + $0x198] sm:$0xf]
  %v198 = vld [vmem:[%s1 + $0x19c] sm:$0xf]
  %v199 = vld [vmem:[%s1 + $0x1a0] sm:$0xf]
  %v200 = vld [vmem:[%s1 + $0x1a4] sm:$0xf]
  %v201 = vld [vmem:[%s1 + $0x1a8] sm:$0xf]
  %v202 = vld [vmem:[%s1 + $0x1ac] sm:$0xf]
  %v203 = vld [vmem:[%s1 + $0x1b0] sm:$0xf]
  %v204 = vld [vmem:[%s1 + $0x1b4] sm:$0xf]
  %v205 = vld [vmem:[%s1 + $0x1b8] sm:$0xf]
  %v206 = vld [vmem:[%s1 + $0x1bc] sm:$0xf]
  %v207 = vld [vmem:[%s1 + $0x1c0] sm:$0xf]
  %v208 = vld [vmem:[%s1 + $0x1c4] sm:$0xf]
  %v209 = vld [vmem:[%s1 + $0x1c8] sm:$0xf]
  %v210 = vld [vmem:[%s1 + $0x1cc] sm:$0xf]
  %v211 = vld [vmem:[%s1 + $0x1d0] sm:$0xf]
  %v212 = vld [vmem:[%s1 + $0x1d4] sm:$0xf]
  %v213 = vld [vmem:[%s1 + $0x1d8] sm:$0xf]
  %v214 = vld [vmem:[%s1 + $0x1dc] sm:$0xf]
  %v215 = vld [vmem:[%s1 + $0x1e0] sm:$0xf]
  %v216 = vld [vmem:[%s1 + $0x1e4] sm:$0xf]
  %v217 = vld [vmem:[%s1 + $0x1e8] sm:$0xf]
  %v218 = vld [vmem:[%s1 + $0x1ec] sm:$0xf]
  %v219 = vld [vmem:[%s1 + $0x1f0] sm:$0xf]
  %v220 = vld [vmem:[%s1 + $0x1f4] sm:$0xf]
  %v221 = vld [vmem:[%s1 + $0x1f8] sm:$0xf]
  %v222 = vld [vmem:[%s1 + $0x1fc] sm:$0xf]
  %v223 = vld [vmem:[%s1 + $0x200] sm:$0xf]
  %v224 = vld [vmem:[%s1 + $0x204] sm:$0xf]
  %v225 = vld [vmem:[%s1 + $0x208] sm:$0xf]
  %v226 = vld [vmem:[%s1 + $0x20c] sm:$0xf]
  %v227 = vld [vmem:[%s1 + $0x210] sm:$0xf]
  %v228 = vld [vmem:[%s1 + $0x214] sm:$0xf]
  %v229 = vld [vmem:[%s1 + $0x218] sm:$0xf]
  %v230 = vld [vmem:[%s1 + $0x21c] sm:$0xf]
  %v231 = vld [vmem:[%s1 + $0x220] sm:$0xf]
  %v232 = vld [vmem:[%s1 + $0x224] sm:$0xf]
  %v233 = vld [vmem:[%s1 + $0x228] sm:$0xf]
  %v234 = vld [vmem:[%s1 + $0x22c] sm:$0xf]
  %v235 = vld [vmem:[%s1 + $0x230] sm:$0xf]
  %v236 = vld [vmem:[%s1 + $0x234] sm:$0xf]
  %v237 = vld [vmem:[%s1 + $0x238] sm:$0xf]
  %v238 = vld [vmem:[%s1 + $0x23c] sm:$0xf]
  %v239 = vld [vmem:[%s2] sm:$0x1]
  %v241 = vlaneseq
  %v242 = vshrl.u32 %v241, 7
  %v243 = vsub.s32 0, %v242
  %v244 = vrot.slane %v239, %v243
  %v326 = vunpack.c.l.b16 %v15
  %v327 = vunpack.c.h.b16 %v15
  %v328 = vunpack.c.l.b16 %v16
  %v329 = vunpack.c.h.b16 %v16
  %v330 = vunpack.c.l.b16 %v17
  %v331 = vunpack.c.h.b16 %v17
  %v332 = vunpack.c.l.b16 %v18
  %v333 = vunpack.c.h.b16 %v18
  %v334 = vunpack.c.l.b16 %v19
  %v335 = vunpack.c.l.b16 %v20
  %v336 = vunpack.c.h.b16 %v20
  %v337 = vunpack.c.l.b16 %v21
  %v338 = vunpack.c.h.b16 %v21
  %v339 = vunpack.c.l.b16 %v22
  %v340 = vunpack.c.h.b16 %v22
  %v341 = vunpack.c.l.b16 %v23
  %v342 = vunpack.c.h.b16 %v23
  %v343 = vunpack.c.l.b16 %v24
  %v344 = vunpack.c.l.b16 %v25
  %v345 = vunpack.c.h.b16 %v25
  %v346 = vunpack.c.l.b16 %v26
  %v347 = vunpack.c.h.b16 %v26
  %v348 = vunpack.c.l.b16 %v27
  %v349 = vunpack.c.h.b16 %v27
  %v350 = vunpack.c.l.b16 %v28
  %v351 = vunpack.c.h.b16 %v28
  %v352 = vunpack.c.l.b16 %v29
  %v353 = vunpack.c.l.b16 %v30
  %v354 = vunpack.c.h.b16 %v30
  %v355 = vunpack.c.l.b16 %v31
  %v356 = vunpack.c.h.b16 %v31
  %v357 = vunpack.c.l.b16 %v32
  %v358 = vunpack.c.h.b16 %v32
  %v359 = vunpack.c.l.b16 %v33
  %v360 = vunpack.c.h.b16 %v33
  %v361 = vunpack.c.l.b16 %v34
  %v362 = vunpack.c.l.b16 %v35
  %v363 = vunpack.c.h.b16 %v35
  %v364 = vunpack.c.l.b16 %v36
  %v365 = vunpack.c.h.b16 %v36
  %v366 = vunpack.c.l.b16 %v37
  %v367 = vunpack.c.h.b16 %v37
  %v368 = vunpack.c.l.b16 %v38
  %v369 = vunpack.c.h.b16 %v38
  %v370 = vunpack.c.l.b16 %v39
  %v371 = vunpack.c.l.b16 %v40
  %v372 = vunpack.c.h.b16 %v40
  %v373 = vunpack.c.l.b16 %v41
  %v374 = vunpack.c.h.b16 %v41
  %v375 = vunpack.c.l.b16 %v42
  %v376 = vunpack.c.h.b16 %v42
  %v377 = vunpack.c.l.b16 %v43
  %v378 = vunpack.c.h.b16 %v43
  %v379 = vunpack.c.l.b16 %v44
  %v380 = vunpack.c.l.b16 %v45
  %v381 = vunpack.c.h.b16 %v45
  %v382 = vunpack.c.l.b16 %v46
  %v383 = vunpack.c.h.b16 %v46
  %v384 = vunpack.c.l.b16 %v47
  %v385 = vunpack.c.h.b16 %v47
  %v386 = vunpack.c.l.b16 %v48
  %v387 = vunpack.c.h.b16 %v48
  %v388 = vunpack.c.l.b16 %v49
  %v389 = vunpack.c.l.b16 %v50
  %v390 = vunpack.c.h.b16 %v50
  %v391 = vunpack.c.l.b16 %v51
  %v392 = vunpack.c.h.b16 %v51
  %v393 = vunpack.c.l.b16 %v52
  %v394 = vunpack.c.h.b16 %v52
  %v395 = vunpack.c.l.b16 %v53
  %v396 = vunpack.c.h.b16 %v53
  %v397 = vunpack.c.l.b16 %v54
  %v398 = vunpack.c.l.b16 %v55
  %v399 = vunpack.c.h.b16 %v55
  %v400 = vunpack.c.l.b16 %v56
  %v401 = vunpack.c.h.b16 %v56
  %v402 = vunpack.c.l.b16 %v57
  %v403 = vunpack.c.h.b16 %v57
  %v404 = vunpack.c.l.b16 %v58
  %v405 = vunpack.c.h.b16 %v58
  %v406 = vunpack.c.l.b16 %v59
  %v407 = vunpack.c.l.b16 %v60
  %v408 = vunpack.c.h.b16 %v60
  %v409 = vunpack.c.l.b16 %v61
  %v410 = vunpack.c.h.b16 %v61
  %v411 = vunpack.c.l.b16 %v62
  %v412 = vunpack.c.h.b16 %v62
  %v413 = vunpack.c.l.b16 %v63
  %v414 = vunpack.c.h.b16 %v63
  %v415 = vunpack.c.l.b16 %v64
  %v416 = vunpack.c.l.b16 %v65
  %v417 = vunpack.c.h.b16 %v65
  %v418 = vunpack.c.l.b16 %v66
  %v419 = vunpack.c.h.b16 %v66
  %v420 = vunpack.c.l.b16 %v67
  %v421 = vunpack.c.h.b16 %v67
  %v422 = vunpack.c.l.b16 %v68
  %v423 = vunpack.c.h.b16 %v68
  %v424 = vunpack.c.l.b16 %v69
  %v425 = vunpack.c.l.b16 %v70
  %v426 = vunpack.c.h.b16 %v70
  %v427 = vunpack.c.l.b16 %v71
  %v428 = vunpack.c.h.b16 %v71
  %v429 = vunpack.c.l.b16 %v72
  %v430 = vunpack.c.h.b16 %v72
  %v431 = vunpack.c.l.b16 %v73
  %v432 = vunpack.c.h.b16 %v73
  %v433 = vunpack.c.l.b16 %v74
  %v434 = vunpack.c.l.b16 %v75
  %v435 = vunpack.c.h.b16 %v75
  %v436 = vunpack.c.l.b16 %v76
  %v437 = vunpack.c.h.b16 %v76
  %v438 = vunpack.c.l.b16 %v77
  %v439 = vunpack.c.h.b16 %v77
  %v440 = vunpack.c.l.b16 %v78
  %v441 = vunpack.c.h.b16 %v78
  %v442 = vunpack.c.l.b16 %v79
  %v443 = vunpack.c.l.b16 %v80
  %v444 = vunpack.c.h.b16 %v80
  %v445 = vunpack.c.l.b16 %v81
  %v446 = vunpack.c.h.b16 %v81
  %v447 = vunpack.c.l.b16 %v82
  %v448 = vunpack.c.h.b16 %v82
  %v449 = vunpack.c.l.b16 %v83
  %v450 = vunpack.c.h.b16 %v83
  %v451 = vunpack.c.l.b16 %v84
  %v452 = vunpack.c.l.b16 %v85
  %v453 = vunpack.c.h.b16 %v85
  %v454 = vunpack.c.l.b16 %v86
  %v455 = vunpack.c.h.b16 %v86
  %v456 = vunpack.c.l.b16 %v87
  %v457 = vunpack.c.h.b16 %v87
  %v458 = vunpack.c.l.b16 %v88
  %v459 = vunpack.c.h.b16 %v88
  %v460 = vunpack.c.l.b16 %v89
  %v461 = vunpack.c.l.b16 %v90
  %v462 = vunpack.c.h.b16 %v90
  %v463 = vunpack.c.l.b16 %v91
  %v464 = vunpack.c.h.b16 %v91
  %v465 = vunpack.c.l.b16 %v92
  %v466 = vunpack.c.h.b16 %v92
  %v467 = vunpack.c.l.b16 %v93
  %v468 = vunpack.c.h.b16 %v93
  %v469 = vunpack.c.l.b16 %v94
  %v470 = vpack.c.b16 %v335, %v326
  %v471 = vpack.c.b16 %v336, %v327
  %v472 = vpack.c.b16 %v337, %v328
  %v473 = vpack.c.b16 %v338, %v329
  %v474 = vpack.c.b16 %v339, %v330
  %v475 = vpack.c.b16 %v340, %v331
  %v476 = vpack.c.b16 %v341, %v332
  %v477 = vpack.c.b16 %v342, %v333
  %v478 = vpack.c.b16 %v343, %v334
  %v479 = vpack.c.b16 %v353, %v344
  %v480 = vpack.c.b16 %v354, %v345
  %v481 = vpack.c.b16 %v355, %v346
  %v482 = vpack.c.b16 %v356, %v347
  %v483 = vpack.c.b16 %v357, %v348
  %v484 = vpack.c.b16 %v358, %v349
  %v485 = vpack.c.b16 %v359, %v350
  %v486 = vpack.c.b16 %v360, %v351
  %v487 = vpack.c.b16 %v361, %v352
  %v488 = vpack.c.b16 %v371, %v362
  %v489 = vpack.c.b16 %v372, %v363
  %v490 = vpack.c.b16 %v373, %v364
  %v491 = vpack.c.b16 %v374, %v365
  %v492 = vpack.c.b16 %v375, %v366
  %v493 = vpack.c.b16 %v376, %v367
  %v494 = vpack.c.b16 %v377, %v368
  %v495 = vpack.c.b16 %v378, %v369
  %v496 = vpack.c.b16 %v379, %v370
  %v497 = vpack.c.b16 %v389, %v380
  %v498 = vpack.c.b16 %v390, %v381
  %v499 = vpack.c.b16 %v391, %v382
  %v500 = vpack.c.b16 %v392, %v383
  %v501 = vpack.c.b16 %v393, %v384
  %v502 = vpack.c.b16 %v394, %v385
  %v503 = vpack.c.b16 %v395, %v386
  %v504 = vpack.c.b16 %v396, %v387
  %v505 = vpack.c.b16 %v397, %v388
  %v506 = vpack.c.b16 %v407, %v398
  %v507 = vpack.c.b16 %v408, %v399
  %v508 = vpack.c.b16 %v409, %v400
  %v509 = vpack.c.b16 %v410, %v401
  %v510 = vpack.c.b16 %v411, %v402
  %v511 = vpack.c.b16 %v412, %v403
  %v512 = vpack.c.b16 %v413, %v404
  %v513 = vpack.c.b16 %v414, %v405
  %v514 = vpack.c.b16 %v415, %v406
  %v515 = vpack.c.b16 %v425, %v416
  %v516 = vpack.c.b16 %v426, %v417
  %v517 = vpack.c.b16 %v427, %v418
  %v518 = vpack.c.b16 %v428, %v419
  %v519 = vpack.c.b16 %v429, %v420
  %v520 = vpack.c.b16 %v430, %v421
  %v521 = vpack.c.b16 %v431, %v422
  %v522 = vpack.c.b16 %v432, %v423
  %v523 = vpack.c.b16 %v433, %v424
  %v524 = vpack.c.b16 %v443, %v434
  %v525 = vpack.c.b16 %v444, %v435
  %v526 = vpack.c.b16 %v445, %v436
  %v527 = vpack.c.b16 %v446, %v437
  %v528 = vpack.c.b16 %v447, %v438
  %v529 = vpack.c.b16 %v448, %v439
  %v530 = vpack.c.b16 %v449, %v440
  %v531 = vpack.c.b16 %v450, %v441
  %v532 = vpack.c.b16 %v451, %v442
  %v533 = vpack.c.b16 %v461, %v452
  %v534 = vpack.c.b16 %v462, %v453
  %v535 = vpack.c.b16 %v463, %v454
  %v536 = vpack.c.b16 %v464, %v455
  %v537 = vpack.c.b16 %v465, %v456
  %v538 = vpack.c.b16 %v466, %v457
  %v539 = vpack.c.b16 %v467, %v458
  %v540 = vpack.c.b16 %v468, %v459
  %v541 = vpack.c.b16 %v469, %v460
  %v758 = vunpack.c.l.b16 %v95
  %v759 = vunpack.c.l.b16 %v96
  %v760 = vunpack.c.l.b16 %v97
  %v761 = vunpack.c.l.b16 %v98
  %v762 = vunpack.c.l.b16 %v99
  %v763 = vunpack.c.l.b16 %v100
  %v764 = vunpack.c.l.b16 %v101
  %v765 = vunpack.c.l.b16 %v102
  %v766 = vunpack.c.l.b16 %v103
  %v767 = vunpack.c.l.b16 %v104
  %v768 = vunpack.c.l.b16 %v105
  %v769 = vunpack.c.l.b16 %v106
  %v770 = vunpack.c.l.b16 %v107
  %v771 = vunpack.c.l.b16 %v108
  %v772 = vunpack.c.l.b16 %v109
  %v773 = vunpack.c.l.b16 %v110
  %v774 = vunpack.c.l.b16 %v111
  %v775 = vunpack.c.l.b16 %v112
  %v776 = vunpack.c.l.b16 %v113
  %v777 = vunpack.c.l.b16 %v114
  %v778 = vunpack.c.l.b16 %v115
  %v779 = vunpack.c.l.b16 %v116
  %v780 = vunpack.c.l.b16 %v117
  %v781 = vunpack.c.l.b16 %v118
  %v782 = vunpack.c.l.b16 %v119
  %v783 = vunpack.c.l.b16 %v120
  %v784 = vunpack.c.l.b16 %v121
  %v785 = vunpack.c.l.b16 %v122
  %v786 = vunpack.c.l.b16 %v123
  %v787 = vunpack.c.l.b16 %v124
  %v788 = vunpack.c.l.b16 %v125
  %v789 = vunpack.c.l.b16 %v126
  %v790 = vunpack.c.l.b16 %v127
  %v791 = vunpack.c.l.b16 %v128
  %v792 = vunpack.c.l.b16 %v129
  %v793 = vunpack.c.l.b16 %v130
  %v794 = vunpack.c.l.b16 %v131
  %v795 = vunpack.c.l.b16 %v132
  %v796 = vunpack.c.l.b16 %v133
  %v797 = vunpack.c.l.b16 %v134
  %v798 = vunpack.c.l.b16 %v135
  %v799 = vunpack.c.l.b16 %v136
  %v800 = vunpack.c.l.b16 %v137
  %v801 = vunpack.c.l.b16 %v138
  %v802 = vunpack.c.l.b16 %v139
  %v803 = vunpack.c.l.b16 %v140
  %v804 = vunpack.c.l.b16 %v141
  %v805 = vunpack.c.l.b16 %v142
  %v806 = vunpack.c.l.b16 %v143
  %v807 = vunpack.c.l.b16 %v144
  %v808 = vunpack.c.l.b16 %v145
  %v809 = vunpack.c.l.b16 %v146
  %v810 = vunpack.c.l.b16 %v147
  %v811 = vunpack.c.l.b16 %v148
  %v812 = vunpack.c.l.b16 %v149
  %v813 = vunpack.c.l.b16 %v150
  %v814 = vunpack.c.l.b16 %v151
  %v815 = vunpack.c.l.b16 %v152
  %v816 = vunpack.c.l.b16 %v153
  %v817 = vunpack.c.l.b16 %v154
  %v818 = vunpack.c.l.b16 %v155
  %v819 = vunpack.c.l.b16 %v156
  %v820 = vunpack.c.l.b16 %v157
  %v821 = vunpack.c.l.b16 %v158
  %v822 = vunpack.c.l.b16 %v159
  %v823 = vunpack.c.l.b16 %v160
  %v824 = vunpack.c.l.b16 %v161
  %v825 = vunpack.c.l.b16 %v162
  %v826 = vunpack.c.l.b16 %v163
  %v827 = vunpack.c.l.b16 %v164
  %v828 = vunpack.c.l.b16 %v165
  %v829 = vunpack.c.l.b16 %v166
  %v830 = vunpack.c.l.b16 %v167
  %v831 = vunpack.c.l.b16 %v168
  %v832 = vunpack.c.l.b16 %v169
  %v833 = vunpack.c.l.b16 %v170
  %v834 = vunpack.c.l.b16 %v171
  %v835 = vunpack.c.l.b16 %v172
  %v836 = vunpack.c.l.b16 %v173
  %v837 = vunpack.c.l.b16 %v174
  %v838 = vunpack.c.l.b16 %v175
  %v839 = vunpack.c.l.b16 %v176
  %v840 = vunpack.c.l.b16 %v177
  %v841 = vunpack.c.l.b16 %v178
  %v842 = vunpack.c.l.b16 %v179
  %v843 = vunpack.c.l.b16 %v180
  %v844 = vunpack.c.l.b16 %v181
  %v845 = vunpack.c.l.b16 %v182
  %v846 = vunpack.c.l.b16 %v183
  %v847 = vunpack.c.l.b16 %v184
  %v848 = vunpack.c.l.b16 %v185
  %v849 = vunpack.c.l.b16 %v186
  %v850 = vunpack.c.l.b16 %v187
  %v851 = vunpack.c.l.b16 %v188
  %v852 = vunpack.c.l.b16 %v189
  %v853 = vunpack.c.l.b16 %v190
  %v854 = vunpack.c.l.b16 %v191
  %v855 = vunpack.c.l.b16 %v192
  %v856 = vunpack.c.l.b16 %v193
  %v857 = vunpack.c.l.b16 %v194
  %v858 = vunpack.c.l.b16 %v195
  %v859 = vunpack.c.l.b16 %v196
  %v860 = vunpack.c.l.b16 %v197
  %v861 = vunpack.c.l.b16 %v198
  %v862 = vunpack.c.l.b16 %v199
  %v863 = vunpack.c.l.b16 %v200
  %v864 = vunpack.c.l.b16 %v201
  %v865 = vunpack.c.l.b16 %v202
  %v866 = vunpack.c.l.b16 %v203
  %v867 = vunpack.c.l.b16 %v204
  %v868 = vunpack.c.l.b16 %v205
  %v869 = vunpack.c.l.b16 %v206
  %v870 = vunpack.c.l.b16 %v207
  %v871 = vunpack.c.l.b16 %v208
  %v872 = vunpack.c.l.b16 %v209
  %v873 = vunpack.c.l.b16 %v210
  %v874 = vunpack.c.l.b16 %v211
  %v875 = vunpack.c.l.b16 %v212
  %v876 = vunpack.c.l.b16 %v213
  %v877 = vunpack.c.l.b16 %v214
  %v878 = vunpack.c.l.b16 %v215
  %v879 = vunpack.c.l.b16 %v216
  %v880 = vunpack.c.l.b16 %v217
  %v881 = vunpack.c.l.b16 %v218
  %v882 = vunpack.c.l.b16 %v219
  %v883 = vunpack.c.l.b16 %v220
  %v884 = vunpack.c.l.b16 %v221
  %v885 = vunpack.c.l.b16 %v222
  %v886 = vunpack.c.l.b16 %v223
  %v887 = vunpack.c.l.b16 %v224
  %v888 = vunpack.c.l.b16 %v225
  %v889 = vunpack.c.l.b16 %v226
  %v890 = vunpack.c.l.b16 %v227
  %v891 = vunpack.c.l.b16 %v228
  %v892 = vunpack.c.l.b16 %v229
  %v893 = vunpack.c.l.b16 %v230
  %v894 = vunpack.c.l.b16 %v231
  %v895 = vunpack.c.l.b16 %v232
  %v896 = vunpack.c.l.b16 %v233
  %v897 = vunpack.c.l.b16 %v234
  %v898 = vunpack.c.l.b16 %v235
  %v899 = vunpack.c.l.b16 %v236
  %v900 = vunpack.c.l.b16 %v237
  %v901 = vunpack.c.l.b16 %v238
  %v902 = vpack.c.b16 %v759, %v758
  %v903 = vpack.c.b16 %v761, %v760
  %v904 = vpack.c.b16 %v763, %v762
  %v905 = vpack.c.b16 %v765, %v764
  %v906 = vpack.c.b16 %v767, %v766
  %v907 = vpack.c.b16 %v769, %v768
  %v908 = vpack.c.b16 %v771, %v770
  %v909 = vpack.c.b16 %v773, %v772
  %v910 = vpack.c.b16 %v775, %v774
  %v911 = vpack.c.b16 %v777, %v776
  %v912 = vpack.c.b16 %v779, %v778
  %v913 = vpack.c.b16 %v781, %v780
  %v914 = vpack.c.b16 %v783, %v782
  %v915 = vpack.c.b16 %v785, %v784
  %v916 = vpack.c.b16 %v787, %v786
  %v917 = vpack.c.b16 %v789, %v788
  %v918 = vpack.c.b16 %v791, %v790
  %v919 = vpack.c.b16 %v793, %v792
  %v920 = vpack.c.b16 %v795, %v794
  %v921 = vpack.c.b16 %v797, %v796
  %v922 = vpack.c.b16 %v799, %v798
  %v923 = vpack.c.b16 %v801, %v800
  %v924 = vpack.c.b16 %v803, %v802
  %v925 = vpack.c.b16 %v805, %v804
  %v926 = vpack.c.b16 %v807, %v806
  %v927 = vpack.c.b16 %v809, %v808
  %v928 = vpack.c.b16 %v811, %v810
  %v929 = vpack.c.b16 %v813, %v812
  %v930 = vpack.c.b16 %v815, %v814
  %v931 = vpack.c.b16 %v817, %v816
  %v932 = vpack.c.b16 %v819, %v818
  %v933 = vpack.c.b16 %v821, %v820
  %v934 = vpack.c.b16 %v823, %v822
  %v935 = vpack.c.b16 %v825, %v824
  %v936 = vpack.c.b16 %v827, %v826
  %v937 = vpack.c.b16 %v829, %v828
  %v938 = vpack.c.b16 %v831, %v830
  %v939 = vpack.c.b16 %v833, %v832
  %v940 = vpack.c.b16 %v835, %v834
  %v941 = vpack.c.b16 %v837, %v836
  %v942 = vpack.c.b16 %v839, %v838
  %v943 = vpack.c.b16 %v841, %v840
  %v944 = vpack.c.b16 %v843, %v842
  %v945 = vpack.c.b16 %v845, %v844
  %v946 = vpack.c.b16 %v847, %v846
  %v947 = vpack.c.b16 %v849, %v848
  %v948 = vpack.c.b16 %v851, %v850
  %v949 = vpack.c.b16 %v853, %v852
  %v950 = vpack.c.b16 %v855, %v854
  %v951 = vpack.c.b16 %v857, %v856
  %v952 = vpack.c.b16 %v859, %v858
  %v953 = vpack.c.b16 %v861, %v860
  %v954 = vpack.c.b16 %v863, %v862
  %v955 = vpack.c.b16 %v865, %v864
  %v956 = vpack.c.b16 %v867, %v866
  %v957 = vpack.c.b16 %v869, %v868
  %v958 = vpack.c.b16 %v871, %v870
  %v959 = vpack.c.b16 %v873, %v872
  %v960 = vpack.c.b16 %v875, %v874
  %v961 = vpack.c.b16 %v877, %v876
  %v962 = vpack.c.b16 %v879, %v878
  %v963 = vpack.c.b16 %v881, %v880
  %v964 = vpack.c.b16 %v883, %v882
  %v965 = vpack.c.b16 %v885, %v884
  %v966 = vpack.c.b16 %v887, %v886
  %v967 = vpack.c.b16 %v889, %v888
  %v968 = vpack.c.b16 %v891, %v890
  %v969 = vpack.c.b16 %v893, %v892
  %v970 = vpack.c.b16 %v895, %v894
  %v971 = vpack.c.b16 %v897, %v896
  %v972 = vpack.c.b16 %v899, %v898
  %v973 = vpack.c.b16 %v901, %v900
  %1046 = vmatprep.subr.bf16.mxu0 0
  %1047 = vmatpush1.bf16.msra.mxu0 %v909
  %1048 = vmatprep.subr.bf16.mxu0 0
  %1049 = vmatpush1.bf16.msra.mxu0 %v908
  %1050 = vmatprep.subr.bf16.mxu0 0
  %1051 = vmatpush1.bf16.msra.mxu0 %v907
  %1052 = vmatprep.subr.bf16.mxu0 0
  %1053 = vmatpush1.bf16.msra.mxu0 %v906
  %1054 = vmatprep.subr.bf16.mxu0 0
  %1055 = vmatpush1.bf16.msra.mxu0 %v905
  %1056 = vmatprep.subr.bf16.mxu0 0
  %1057 = vmatpush1.bf16.msra.mxu0 %v904
  %1058 = vmatprep.subr.bf16.mxu0 0
  %1059 = vmatpush1.bf16.msra.mxu0 %v903
  %1060 = vmatprep.subr.bf16.mxu0 0
  %1061 = vmatpush1.bf16.msra.mxu0 %v902
  %1062 = vmatprep.subr.bf16.mxu0 0
  %1063 = vmatpush2.bf16.msra.mxu0 %v917
  %1064 = vmatprep.subr.bf16.mxu0 0
  %1065 = vmatpush2.bf16.msra.mxu0 %v916
  %1066 = vmatprep.subr.bf16.mxu0 0
  %1067 = vmatpush2.bf16.msra.mxu0 %v915
  %1068 = vmatprep.subr.bf16.mxu0 0
  %1069 = vmatpush2.bf16.msra.mxu0 %v914
  %1070 = vmatprep.subr.bf16.mxu0 0
  %1071 = vmatpush2.bf16.msra.mxu0 %v913
  %1072 = vmatprep.subr.bf16.mxu0 0
  %1073 = vmatpush2.bf16.msra.mxu0 %v912
  %1074 = vmatprep.subr.bf16.mxu0 0
  %1075 = vmatpush2.bf16.msra.mxu0 %v911
  %1076 = vmatprep.subr.bf16.mxu0 0
  %1077 = vmatpush2.bf16.msra.mxu0 %v910
  %1078 = vmatprep.mubr.bf16.mxu0 %v471
  %1079 = vmatmul.mubr.bf16.gmra.mxu0 %v470
  %v1080 = vpop.f32.mrf.mxu0
  %v1081 = vadd.f32 %v244, %v1080
  %v1082 = vpop.f32.mrf.mxu0
  %v1083 = vpop.f32.mrf.mxu0
  %v1084 = vadd.f32 %v244, %v1083
  %v1085 = vpop.f32.mrf.mxu0
  %1086 = vmatprep.mubr.bf16.mxu0 %v480
  %1087 = vmatmul.mubr.bf16.gmra.mxu0 %v479
  %v1088 = vpop.f32.mrf.mxu0
  %v1089 = vadd.f32 %v244, %v1088
  %v1090 = vpop.f32.mrf.mxu0
  %v1091 = vpop.f32.mrf.mxu0
  %v1092 = vadd.f32 %v244, %v1091
  %v1093 = vpop.f32.mrf.mxu0
  %1094 = vmatprep.mubr.bf16.mxu0 %v489
  %1095 = vmatmul.mubr.bf16.gmra.mxu0 %v488
  %v1096 = vpop.f32.mrf.mxu0
  %v1097 = vadd.f32 %v244, %v1096
  %v1098 = vpop.f32.mrf.mxu0
  %v1099 = vpop.f32.mrf.mxu0
  %v1100 = vadd.f32 %v244, %v1099
  %v1101 = vpop.f32.mrf.mxu0
  %1102 = vmatprep.mubr.bf16.mxu0 %v498
  %1103 = vmatmul.mubr.bf16.gmra.mxu0 %v497
  %v1104 = vpop.f32.mrf.mxu0
  %v1105 = vadd.f32 %v244, %v1104
  %v1106 = vpop.f32.mrf.mxu0
  %v1107 = vpop.f32.mrf.mxu0
  %v1108 = vadd.f32 %v244, %v1107
  %v1109 = vpop.f32.mrf.mxu0
  %1110 = vmatprep.mubr.bf16.mxu0 %v507
  %1111 = vmatmul.mubr.bf16.gmra.mxu0 %v506
  %v1112 = vpop.f32.mrf.mxu0
  %v1113 = vadd.f32 %v244, %v1112
  %v1114 = vpop.f32.mrf.mxu0
  %v1115 = vpop.f32.mrf.mxu0
  %v1116 = vadd.f32 %v244, %v1115
  %v1117 = vpop.f32.mrf.mxu0
  %1118 = vmatprep.mubr.bf16.mxu0 %v516
  %1119 = vmatmul.mubr.bf16.gmra.mxu0 %v515
  %v1120 = vpop.f32.mrf.mxu0
  %v1121 = vadd.f32 %v244, %v1120
  %v1122 = vpop.f32.mrf.mxu0
  %v1123 = vpop.f32.mrf.mxu0
  %v1124 = vadd.f32 %v244, %v1123
  %v1125 = vpop.f32.mrf.mxu0
  %1126 = vmatprep.mubr.bf16.mxu0 %v525
  %1127 = vmatmul.mubr.bf16.gmra.mxu0 %v524
  %v1128 = vpop.f32.mrf.mxu0
  %v1129 = vadd.f32 %v244, %v1128
  %v1130 = vpop.f32.mrf.mxu0
  %v1131 = vpop.f32.mrf.mxu0
  %v1132 = vadd.f32 %v244, %v1131
  %v1133 = vpop.f32.mrf.mxu0
  %1134 = vmatprep.mubr.bf16.mxu0 %v534
  %1135 = vmatmul.mubr.bf16.gmra.mxu0 %v533
  %v1136 = vpop.f32.mrf.mxu0
  %v1137 = vadd.f32 %v244, %v1136
  %v1138 = vpop.f32.mrf.mxu0
  %v1139 = vpop.f32.mrf.mxu0
  %v1140 = vadd.f32 %v244, %v1139
  %v1141 = vpop.f32.mrf.mxu0
  %1142 = vdwg.mxu0
  %1143 = vmatprep.subr.bf16.mxu0 0
  %1144 = vmatpush1.bf16.msra.mxu0 %v925
  %1145 = vmatprep.subr.bf16.mxu0 0
  %1146 = vmatpush1.bf16.msra.mxu0 %v924
  %1147 = vmatprep.subr.bf16.mxu0 0
  %1148 = vmatpush1.bf16.msra.mxu0 %v923
  %1149 = vmatprep.subr.bf16.mxu0 0
  %1150 = vmatpush1.bf16.msra.mxu0 %v922
  %1151 = vmatprep.subr.bf16.mxu0 0
  %1152 = vmatpush1.bf16.msra.mxu0 %v921
  %1153 = vmatprep.subr.bf16.mxu0 0
  %1154 = vmatpush1.bf16.msra.mxu0 %v920
  %1155 = vmatprep.subr.bf16.mxu0 0
  %1156 = vmatpush1.bf16.msra.mxu0 %v919
  %1157 = vmatprep.subr.bf16.mxu0 0
  %1158 = vmatpush1.bf16.msra.mxu0 %v918
  %1159 = vmatprep.subr.bf16.mxu0 0
  %1160 = vmatpush2.bf16.msra.mxu0 %v933
  %1161 = vmatprep.subr.bf16.mxu0 0
  %1162 = vmatpush2.bf16.msra.mxu0 %v932
  %1163 = vmatprep.subr.bf16.mxu0 0
  %1164 = vmatpush2.bf16.msra.mxu0 %v931
  %1165 = vmatprep.subr.bf16.mxu0 0
  %1166 = vmatpush2.bf16.msra.mxu0 %v930
  %1167 = vmatprep.subr.bf16.mxu0 0
  %1168 = vmatpush2.bf16.msra.mxu0 %v929
  %1169 = vmatprep.subr.bf16.mxu0 0
  %1170 = vmatpush2.bf16.msra.mxu0 %v928
  %1171 = vmatprep.subr.bf16.mxu0 0
  %1172 = vmatpush2.bf16.msra.mxu0 %v927
  %1173 = vmatprep.subr.bf16.mxu0 0
  %1174 = vmatpush2.bf16.msra.mxu0 %v926
  %1175 = vmatprep.mubr.bf16.mxu0 %v473
  %1176 = vmatmul.mubr.bf16.gmra.mxu0 %v472
  %v1177 = vpop.f32.mrf.mxu0
  %v1178 = vadd.f32 %v1081, %v1177
  %v1179 = vpop.f32.mrf.mxu0
  %v1180 = vpop.f32.mrf.mxu0
  %v1181 = vadd.f32 %v1084, %v1180
  %v1182 = vpop.f32.mrf.mxu0
  %1183 = vmatprep.mubr.bf16.mxu0 %v482
  %1184 = vmatmul.mubr.bf16.gmra.mxu0 %v481
  %v1185 = vpop.f32.mrf.mxu0
  %v1186 = vadd.f32 %v1089, %v1185
  %v1187 = vpop.f32.mrf.mxu0
  %v1188 = vpop.f32.mrf.mxu0
  %v1189 = vadd.f32 %v1092, %v1188
  %v1190 = vpop.f32.mrf.mxu0
  %1191 = vmatprep.mubr.bf16.mxu0 %v491
  %1192 = vmatmul.mubr.bf16.gmra.mxu0 %v490
  %v1193 = vpop.f32.mrf.mxu0
  %v1194 = vadd.f32 %v1097, %v1193
  %v1195 = vpop.f32.mrf.mxu0
  %v1196 = vpop.f32.mrf.mxu0
  %v1197 = vadd.f32 %v1100, %v1196
  %v1198 = vpop.f32.mrf.mxu0
  %1199 = vmatprep.mubr.bf16.mxu0 %v500
  %1200 = vmatmul.mubr.bf16.gmra.mxu0 %v499
  %v1201 = vpop.f32.mrf.mxu0
  %v1202 = vadd.f32 %v1105, %v1201
  %v1203 = vpop.f32.mrf.mxu0
  %v1204 = vpop.f32.mrf.mxu0
  %v1205 = vadd.f32 %v1108, %v1204
  %v1206 = vpop.f32.mrf.mxu0
  %1207 = vmatprep.mubr.bf16.mxu0 %v509
  %1208 = vmatmul.mubr.bf16.gmra.mxu0 %v508
  %v1209 = vpop.f32.mrf.mxu0
  %v1210 = vadd.f32 %v1113, %v1209
  %v1211 = vpop.f32.mrf.mxu0
  %v1212 = vpop.f32.mrf.mxu0
  %v1213 = vadd.f32 %v1116, %v1212
  %v1214 = vpop.f32.mrf.mxu0
  %1215 = vmatprep.mubr.bf16.mxu0 %v518
  %1216 = vmatmul.mubr.bf16.gmra.mxu0 %v517
  %v1217 = vpop.f32.mrf.mxu0
  %v1218 = vadd.f32 %v1121, %v1217
  %v1219 = vpop.f32.mrf.mxu0
  %v1220 = vpop.f32.mrf.mxu0
  %v1221 = vadd.f32 %v1124, %v1220
  %v1222 = vpop.f32.mrf.mxu0
  %1223 = vmatprep.mubr.bf16.mxu0 %v527
  %1224 = vmatmul.mubr.bf16.gmra.mxu0 %v526
  %v1225 = vpop.f32.mrf.mxu0
  %v1226 = vadd.f32 %v1129, %v1225
  %v1227 = vpop.f32.mrf.mxu0
  %v1228 = vpop.f32.mrf.mxu0
  %v1229 = vadd.f32 %v1132, %v1228
  %v1230 = vpop.f32.mrf.mxu0
  %1231 = vmatprep.mubr.bf16.mxu0 %v536
  %1232 = vmatmul.mubr.bf16.gmra.mxu0 %v535
  %v1233 = vpop.f32.mrf.mxu0
  %v1234 = vadd.f32 %v1137, %v1233
  %v1235 = vpop.f32.mrf.mxu0
  %v1236 = vpop.f32.mrf.mxu0
  %v1237 = vadd.f32 %v1140, %v1236
  %v1238 = vpop.f32.mrf.mxu0
  %1239 = vdwg.mxu0
  %1240 = vmatprep.subr.bf16.mxu0 0
  %1241 = vmatpush1.bf16.msra.mxu0 %v941
  %1242 = vmatprep.subr.bf16.mxu0 0
  %1243 = vmatpush1.bf16.msra.mxu0 %v940
  %1244 = vmatprep.subr.bf16.mxu0 0
  %1245 = vmatpush1.bf16.msra.mxu0 %v939
  %1246 = vmatprep.subr.bf16.mxu0 0
  %1247 = vmatpush1.bf16.msra.mxu0 %v938
  %1248 = vmatprep.subr.bf16.mxu0 0
  %1249 = vmatpush1.bf16.msra.mxu0 %v937
  %1250 = vmatprep.subr.bf16.mxu0 0
  %1251 = vmatpush1.bf16.msra.mxu0 %v936
  %1252 = vmatprep.subr.bf16.mxu0 0
  %1253 = vmatpush1.bf16.msra.mxu0 %v935
  %1254 = vmatprep.subr.bf16.mxu0 0
  %1255 = vmatpush1.bf16.msra.mxu0 %v934
  %1256 = vmatprep.subr.bf16.mxu0 0
  %1257 = vmatpush2.bf16.msra.mxu0 %v949
  %1258 = vmatprep.subr.bf16.mxu0 0
  %1259 = vmatpush2.bf16.msra.mxu0 %v948
  %1260 = vmatprep.subr.bf16.mxu0 0
  %1261 = vmatpush2.bf16.msra.mxu0 %v947
  %1262 = vmatprep.subr.bf16.mxu0 0
  %1263 = vmatpush2.bf16.msra.mxu0 %v946
  %1264 = vmatprep.subr.bf16.mxu0 0
  %1265 = vmatpush2.bf16.msra.mxu0 %v945
  %1266 = vmatprep.subr.bf16.mxu0 0
  %1267 = vmatpush2.bf16.msra.mxu0 %v944
  %1268 = vmatprep.subr.bf16.mxu0 0
  %1269 = vmatpush2.bf16.msra.mxu0 %v943
  %1270 = vmatprep.subr.bf16.mxu0 0
  %1271 = vmatpush2.bf16.msra.mxu0 %v942
  %1272 = vmatprep.mubr.bf16.mxu0 %v475
  %1273 = vmatmul.mubr.bf16.gmra.mxu0 %v474
  %v1274 = vpop.f32.mrf.mxu0
  %v1275 = vadd.f32 %v1178, %v1274
  %v1276 = vpop.f32.mrf.mxu0
  %v1277 = vpop.f32.mrf.mxu0
  %v1278 = vadd.f32 %v1181, %v1277
  %v1279 = vpop.f32.mrf.mxu0
  %1280 = vmatprep.mubr.bf16.mxu0 %v484
  %1281 = vmatmul.mubr.bf16.gmra.mxu0 %v483
  %v1282 = vpop.f32.mrf.mxu0
  %v1283 = vadd.f32 %v1186, %v1282
  %v1284 = vpop.f32.mrf.mxu0
  %v1285 = vpop.f32.mrf.mxu0
  %v1286 = vadd.f32 %v1189, %v1285
  %v1287 = vpop.f32.mrf.mxu0
  %1288 = vmatprep.mubr.bf16.mxu0 %v493
  %1289 = vmatmul.mubr.bf16.gmra.mxu0 %v492
  %v1290 = vpop.f32.mrf.mxu0
  %v1291 = vadd.f32 %v1194, %v1290
  %v1292 = vpop.f32.mrf.mxu0
  %v1293 = vpop.f32.mrf.mxu0
  %v1294 = vadd.f32 %v1197, %v1293
  %v1295 = vpop.f32.mrf.mxu0
  %1296 = vmatprep.mubr.bf16.mxu0 %v502
  %1297 = vmatmul.mubr.bf16.gmra.mxu0 %v501
  %v1298 = vpop.f32.mrf.mxu0
  %v1299 = vadd.f32 %v1202, %v1298
  %v1300 = vpop.f32.mrf.mxu0
  %v1301 = vpop.f32.mrf.mxu0
  %v1302 = vadd.f32 %v1205, %v1301
  %v1303 = vpop.f32.mrf.mxu0
  %1304 = vmatprep.mubr.bf16.mxu0 %v511
  %1305 = vmatmul.mubr.bf16.gmra.mxu0 %v510
  %v1306 = vpop.f32.mrf.mxu0
  %v1307 = vadd.f32 %v1210, %v1306
  %v1308 = vpop.f32.mrf.mxu0
  %v1309 = vpop.f32.mrf.mxu0
  %v1310 = vadd.f32 %v1213, %v1309
  %v1311 = vpop.f32.mrf.mxu0
  %1312 = vmatprep.mubr.bf16.mxu0 %v520
  %1313 = vmatmul.mubr.bf16.gmra.mxu0 %v519
  %v1314 = vpop.f32.mrf.mxu0
  %v1315 = vadd.f32 %v1218, %v1314
  %v1316 = vpop.f32.mrf.mxu0
  %v1317 = vpop.f32.mrf.mxu0
  %v1318 = vadd.f32 %v1221, %v1317
  %v1319 = vpop.f32.mrf.mxu0
  %1320 = vmatprep.mubr.bf16.mxu0 %v529
  %1321 = vmatmul.mubr.bf16.gmra.mxu0 %v528
  %v1322 = vpop.f32.mrf.mxu0
  %v1323 = vadd.f32 %v1226, %v1322
  %v1324 = vpop.f32.mrf.mxu0
  %v1325 = vpop.f32.mrf.mxu0
  %v1326 = vadd.f32 %v1229, %v1325
  %v1327 = vpop.f32.mrf.mxu0
  %1328 = vmatprep.mubr.bf16.mxu0 %v538
  %1329 = vmatmul.mubr.bf16.gmra.mxu0 %v537
  %v1330 = vpop.f32.mrf.mxu0
  %v1331 = vadd.f32 %v1234, %v1330
  %v1332 = vpop.f32.mrf.mxu0
  %v1333 = vpop.f32.mrf.mxu0
  %v1334 = vadd.f32 %v1237, %v1333
  %v1335 = vpop.f32.mrf.mxu0
  %1336 = vdwg.mxu0
  %1337 = vmatprep.subr.bf16.mxu0 0
  %1338 = vmatpush1.bf16.msra.mxu0 %v957
  %1339 = vmatprep.subr.bf16.mxu0 0
  %1340 = vmatpush1.bf16.msra.mxu0 %v956
  %1341 = vmatprep.subr.bf16.mxu0 0
  %1342 = vmatpush1.bf16.msra.mxu0 %v955
  %1343 = vmatprep.subr.bf16.mxu0 0
  %1344 = vmatpush1.bf16.msra.mxu0 %v954
  %1345 = vmatprep.subr.bf16.mxu0 0
  %1346 = vmatpush1.bf16.msra.mxu0 %v953
  %1347 = vmatprep.subr.bf16.mxu0 0
  %1348 = vmatpush1.bf16.msra.mxu0 %v952
  %1349 = vmatprep.subr.bf16.mxu0 0
  %1350 = vmatpush1.bf16.msra.mxu0 %v951
  %1351 = vmatprep.subr.bf16.mxu0 0
  %1352 = vmatpush1.bf16.msra.mxu0 %v950
  %1353 = vmatprep.subr.bf16.mxu0 0
  %1354 = vmatpush2.bf16.msra.mxu0 %v965
  %1355 = vmatprep.subr.bf16.mxu0 0
  %1356 = vmatpush2.bf16.msra.mxu0 %v964
  %1357 = vmatprep.subr.bf16.mxu0 0
  %1358 = vmatpush2.bf16.msra.mxu0 %v963
  %1359 = vmatprep.subr.bf16.mxu0 0
  %1360 = vmatpush2.bf16.msra.mxu0 %v962
  %1361 = vmatprep.subr.bf16.mxu0 0
  %1362 = vmatpush2.bf16.msra.mxu0 %v961
  %1363 = vmatprep.subr.bf16.mxu0 0
  %1364 = vmatpush2.bf16.msra.mxu0 %v960
  %1365 = vmatprep.subr.bf16.mxu0 0
  %1366 = vmatpush2.bf16.msra.mxu0 %v959
  %1367 = vmatprep.subr.bf16.mxu0 0
  %1368 = vmatpush2.bf16.msra.mxu0 %v958
  %1369 = vmatprep.mubr.bf16.mxu0 %v477
  %1370 = vmatmul.mubr.bf16.gmra.mxu0 %v476
  %v1371 = vpop.f32.mrf.mxu0
  %v1372 = vadd.f32 %v1275, %v1371
  %v1373 = vpop.f32.mrf.mxu0
  %v1374 = vpop.f32.mrf.mxu0
  %v1375 = vadd.f32 %v1278, %v1374
  %v1376 = vpop.f32.mrf.mxu0
  %1377 = vmatprep.mubr.bf16.mxu0 %v486
  %1378 = vmatmul.mubr.bf16.gmra.mxu0 %v485
  %v1379 = vpop.f32.mrf.mxu0
  %v1380 = vadd.f32 %v1283, %v1379
  %v1381 = vpop.f32.mrf.mxu0
  %v1382 = vpop.f32.mrf.mxu0
  %v1383 = vadd.f32 %v1286, %v1382
  %v1384 = vpop.f32.mrf.mxu0
  %1385 = vmatprep.mubr.bf16.mxu0 %v495
  %1386 = vmatmul.mubr.bf16.gmra.mxu0 %v494
  %v1387 = vpop.f32.mrf.mxu0
  %v1388 = vadd.f32 %v1291, %v1387
  %v1389 = vpop.f32.mrf.mxu0
  %v1390 = vpop.f32.mrf.mxu0
  %v1391 = vadd.f32 %v1294, %v1390
  %v1392 = vpop.f32.mrf.mxu0
  %1393 = vmatprep.mubr.bf16.mxu0 %v504
  %1394 = vmatmul.mubr.bf16.gmra.mxu0 %v503
  %v1395 = vpop.f32.mrf.mxu0
  %v1396 = vadd.f32 %v1299, %v1395
  %v1397 = vpop.f32.mrf.mxu0
  %v1398 = vpop.f32.mrf.mxu0
  %v1399 = vadd.f32 %v1302, %v1398
  %v1400 = vpop.f32.mrf.mxu0
  %1401 = vmatprep.mubr.bf16.mxu0 %v513
  %1402 = vmatmul.mubr.bf16.gmra.mxu0 %v512
  %v1403 = vpop.f32.mrf.mxu0
  %v1404 = vadd.f32 %v1307, %v1403
  %v1405 = vpop.f32.mrf.mxu0
  %v1406 = vpop.f32.mrf.mxu0
  %v1407 = vadd.f32 %v1310, %v1406
  %v1408 = vpop.f32.mrf.mxu0
  %1409 = vmatprep.mubr.bf16.mxu0 %v522
  %1410 = vmatmul.mubr.bf16.gmra.mxu0 %v521
  %v1411 = vpop.f32.mrf.mxu0
  %v1412 = vadd.f32 %v1315, %v1411
  %v1413 = vpop.f32.mrf.mxu0
  %v1414 = vpop.f32.mrf.mxu0
  %v1415 = vadd.f32 %v1318, %v1414
  %v1416 = vpop.f32.mrf.mxu0
  %1417 = vmatprep.mubr.bf16.mxu0 %v531
  %1418 = vmatmul.mubr.bf16.gmra.mxu0 %v530
  %v1419 = vpop.f32.mrf.mxu0
  %v1420 = vadd.f32 %v1323, %v1419
  %v1421 = vpop.f32.mrf.mxu0
  %v1422 = vpop.f32.mrf.mxu0
  %v1423 = vadd.f32 %v1326, %v1422
  %v1424 = vpop.f32.mrf.mxu0
  %1425 = vmatprep.mubr.bf16.mxu0 %v540
  %1426 = vmatmul.mubr.bf16.gmra.mxu0 %v539
  %v1427 = vpop.f32.mrf.mxu0
  %v1428 = vadd.f32 %v1331, %v1427
  %v1429 = vpop.f32.mrf.mxu0
  %v1430 = vpop.f32.mrf.mxu0
  %v1431 = vadd.f32 %v1334, %v1430
  %v1432 = vpop.f32.mrf.mxu0
  %1433 = vdwg.mxu0
  %1434 = vmatprep.subr.bf16.mxu0 0
  %1435 = vmatpush1.bf16.msra.mxu0 %v973
  %1436 = vmatprep.subr.bf16.mxu0 0
  %1437 = vmatpush1.bf16.msra.mxu0 %v972
  %1438 = vmatprep.subr.bf16.mxu0 0
  %1439 = vmatpush1.bf16.msra.mxu0 %v971
  %1440 = vmatprep.subr.bf16.mxu0 0
  %1441 = vmatpush1.bf16.msra.mxu0 %v970
  %1442 = vmatprep.subr.bf16.mxu0 0
  %1443 = vmatpush1.bf16.msra.mxu0 %v969
  %1444 = vmatprep.subr.bf16.mxu0 0
  %1445 = vmatpush1.bf16.msra.mxu0 %v968
  %1446 = vmatprep.subr.bf16.mxu0 0
  %1447 = vmatpush1.bf16.msra.mxu0 %v967
  %1448 = vmatprep.subr.bf16.mxu0 0
  %1449 = vmatpush1.bf16.msra.mxu0 %v966
  %1450 = vmatprep.subr.bf16.mxu0 0
  %1451 = vmatpush2.bf16.msra.mxu0 0
  %1452 = vmatprep.subr.bf16.mxu0 0
  %1453 = vmatpush2.bf16.msra.mxu0 0
  %1454 = vmatprep.subr.bf16.mxu0 0
  %1455 = vmatpush2.bf16.msra.mxu0 0
  %1456 = vmatprep.subr.bf16.mxu0 0
  %1457 = vmatpush2.bf16.msra.mxu0 0
  %1458 = vmatprep.subr.bf16.mxu0 0
  %1459 = vmatpush2.bf16.msra.mxu0 0
  %1460 = vmatprep.subr.bf16.mxu0 0
  %1461 = vmatpush2.bf16.msra.mxu0 0
  %1462 = vmatprep.subr.bf16.mxu0 0
  %1463 = vmatpush2.bf16.msra.mxu0 0
  %1464 = vmatprep.subr.bf16.mxu0 0
  %1465 = vmatpush2.bf16.msra.mxu0 0
  %1466 = vmatprep.mubr.bf16.mxu0 0
  %1467 = vmatmul.mubr.bf16.gmra.mxu0 %v478
  %v1468 = vpop.f32.mrf.mxu0
  %v1469 = vadd.f32 %v1372, %v1468
  %v1470 = vpop.f32.mrf.mxu0
  %v1471 = vpop.f32.mrf.mxu0
  %v1472 = vadd.f32 %v1375, %v1471
  %v1473 = vpop.f32.mrf.mxu0
  %1474 = vmatprep.mubr.bf16.mxu0 0
  %1475 = vmatmul.mubr.bf16.gmra.mxu0 %v487
  %v1476 = vpop.f32.mrf.mxu0
  %v1477 = vadd.f32 %v1380, %v1476
  %v1478 = vpop.f32.mrf.mxu0
  %v1479 = vpop.f32.mrf.mxu0
  %v1480 = vadd.f32 %v1383, %v1479
  %v1481 = vpop.f32.mrf.mxu0
  %1482 = vmatprep.mubr.bf16.mxu0 0
  %1483 = vmatmul.mubr.bf16.gmra.mxu0 %v496
  %v1484 = vpop.f32.mrf.mxu0
  %v1485 = vadd.f32 %v1388, %v1484
  %v1486 = vpop.f32.mrf.mxu0
  %v1487 = vpop.f32.mrf.mxu0
  %v1488 = vadd.f32 %v1391, %v1487
  %v1489 = vpop.f32.mrf.mxu0
  %1490 = vmatprep.mubr.bf16.mxu0 0
  %1491 = vmatmul.mubr.bf16.gmra.mxu0 %v505
  %v1492 = vpop.f32.mrf.mxu0
  %v1493 = vadd.f32 %v1396, %v1492
  %v1494 = vpop.f32.mrf.mxu0
  %v1495 = vpop.f32.mrf.mxu0
  %v1496 = vadd.f32 %v1399, %v1495
  %v1497 = vpop.f32.mrf.mxu0
  %1498 = vmatprep.mubr.bf16.mxu0 0
  %1499 = vmatmul.mubr.bf16.gmra.mxu0 %v514
  %v1500 = vpop.f32.mrf.mxu0
  %v1501 = vadd.f32 %v1404, %v1500
  %v1502 = vpop.f32.mrf.mxu0
  %v1503 = vpop.f32.mrf.mxu0
  %v1504 = vadd.f32 %v1407, %v1503
  %v1505 = vpop.f32.mrf.mxu0
  %1506 = vmatprep.mubr.bf16.mxu0 0
  %1507 = vmatmul.mubr.bf16.gmra.mxu0 %v523
  %v1508 = vpop.f32.mrf.mxu0
  %v1509 = vadd.f32 %v1412, %v1508
  %v1510 = vpop.f32.mrf.mxu0
  %v1511 = vpop.f32.mrf.mxu0
  %v1512 = vadd.f32 %v1415, %v1511
  %v1513 = vpop.f32.mrf.mxu0
  %1514 = vmatprep.mubr.bf16.mxu0 0
  %1515 = vmatmul.mubr.bf16.gmra.mxu0 %v532
  %v1516 = vpop.f32.mrf.mxu0
  %v1517 = vadd.f32 %v1420, %v1516
  %v1518 = vpop.f32.mrf.mxu0
  %v1519 = vpop.f32.mrf.mxu0
  %v1520 = vadd.f32 %v1423, %v1519
  %v1521 = vpop.f32.mrf.mxu0
  %1522 = vmatprep.mubr.bf16.mxu0 0
  %1523 = vmatmul.mubr.bf16.gmra.mxu0 %v541
  %v1524 = vpop.f32.mrf.mxu0
  %v1525 = vadd.f32 %v1428, %v1524
  %v1526 = vpop.f32.mrf.mxu0
  %v1527 = vpop.f32.mrf.mxu0
  %v1528 = vadd.f32 %v1431, %v1527
  %v1529 = vpop.f32.mrf.mxu0
  %1530 = vdwg.mxu0
  %v1531 = vmax.f32 %v1469, 0.0
  %v1532 = vmax.f32 %v1472, 0.0
  %v1533 = vmax.f32 %v1477, 0.0
  %v1534 = vmax.f32 %v1480, 0.0
  %v1535 = vmax.f32 %v1485, 0.0
  %v1536 = vmax.f32 %v1488, 0.0
  %v1537 = vmax.f32 %v1493, 0.0
  %v1538 = vmax.f32 %v1496, 0.0
  %v1539 = vmax.f32 %v1501, 0.0
  %v1540 = vmax.f32 %v1504, 0.0
  %v1541 = vmax.f32 %v1509, 0.0
  %v1542 = vmax.f32 %v1512, 0.0
  %v1543 = vmax.f32 %v1517, 0.0
  %v1544 = vmax.f32 %v1520, 0.0
  %v1545 = vmax.f32 %v1525, 0.0
  %v1546 = vmax.f32 %v1528, 0.0
  %v1547 = vpack.c.bf16 %v1532, %v1531
  %v1548 = vpack.c.bf16 %v1534, %v1533
  %v1549 = vpack.c.bf16 %v1536, %v1535
  %v1550 = vpack.c.bf16 %v1538, %v1537
  %v1551 = vpack.c.bf16 %v1540, %v1539
  %v1552 = vpack.c.bf16 %v1542, %v1541
  %v1553 = vpack.c.bf16 %v1544, %v1543
  %v1554 = vpack.c.bf16 %v1546, %v1545
  %v1563 = vunpack.c.l.b16 %v1547
  %v1564 = vunpack.c.h.b16 %v1547
  %v1565 = vunpack.c.l.b16 %v1548
  %v1566 = vunpack.c.h.b16 %v1548
  %v1567 = vunpack.c.l.b16 %v1549
  %v1568 = vunpack.c.h.b16 %v1549
  %v1569 = vunpack.c.l.b16 %v1550
  %v1570 = vunpack.c.h.b16 %v1550
  %v1571 = vunpack.c.l.b16 %v1551
  %v1572 = vunpack.c.h.b16 %v1551
  %v1573 = vunpack.c.l.b16 %v1552
  %v1574 = vunpack.c.h.b16 %v1552
  %v1575 = vunpack.c.l.b16 %v1553
  %v1576 = vunpack.c.h.b16 %v1553
  %v1577 = vunpack.c.l.b16 %v1554
  %v1578 = vunpack.c.h.b16 %v1554
  %v1579 = vpack.c.b16 %v1563, %v1563
  %v1580 = vpack.c.b16 %v1564, %v1564
  %v1581 = vpack.c.b16 %v1565, %v1565
  %v1582 = vpack.c.b16 %v1566, %v1566
  %v1583 = vpack.c.b16 %v1567, %v1567
  %v1584 = vpack.c.b16 %v1568, %v1568
  %v1585 = vpack.c.b16 %v1569, %v1569
  %v1586 = vpack.c.b16 %v1570, %v1570
  %v1587 = vpack.c.b16 %v1571, %v1571
  %v1588 = vpack.c.b16 %v1572, %v1572
  %v1589 = vpack.c.b16 %v1573, %v1573
  %v1590 = vpack.c.b16 %v1574, %v1574
  %v1591 = vpack.c.b16 %v1575, %v1575
  %v1592 = vpack.c.b16 %v1576, %v1576
  %v1593 = vpack.c.b16 %v1577, %v1577
  %v1594 = vpack.c.b16 %v1578, %v1578
  %1611 = vst [vmem:[%s3] sm:$0xf] %v1579
  %1612 = vst [vmem:[%s3 + $0x4] sm:$0xf] %v1580
  %1613 = vst [vmem:[%s3 + $0x8] sm:$0xf] %v1581
  %1614 = vst [vmem:[%s3 + $0xc] sm:$0xf] %v1582
  %1615 = vst [vmem:[%s3 + $0x10] sm:$0xf] %v1583
  %1616 = vst [vmem:[%s3 + $0x14] sm:$0xf] %v1584
  %1617 = vst [vmem:[%s3 + $0x18] sm:$0xf] %v1585
  %1618 = vst [vmem:[%s3 + $0x1c] sm:$0xf] %v1586
  %1619 = vst [vmem:[%s3 + $0x20] sm:$0xf] %v1587
  %1620 = vst [vmem:[%s3 + $0x24] sm:$0xf] %v1588
  %1621 = vst [vmem:[%s3 + $0x28] sm:$0xf] %v1589
  %1622 = vst [vmem:[%s3 + $0x2c] sm:$0xf] %v1590
  %1623 = vst [vmem:[%s3 + $0x30] sm:$0xf] %v1591
  %1624 = vst [vmem:[%s3 + $0x34] sm:$0xf] %v1592
  %1625 = vst [vmem:[%s3 + $0x38] sm:$0xf] %v1593
  %1626 = vst [vmem:[%s3 + $0x3c] sm:$0xf] %v1594
  // Predicated region
  $region14: #{basic_block_forward.2} parent=0 // pred_check
    _
  $region15: #{basic_block_forward.2} parent=0 // pred_check_branch
    %1628 = sbr.rel (0) target = $region17
  $region16: #{basic_block_forward.2} parent=0 // pred_region
    _
  $region17: #{basic_block_forward.2} parent=0 // pred_fallthru
    _
  // Predicated region
  $region18: #{basic_block_forward.2} parent=0 // pred_check
    _
  $region19: #{basic_block_forward.2} parent=0 // pred_check_branch
    %1630 = sbr.rel (0) target = $region21
  $region20: #{basic_block_forward.2} parent=0 // pred_region
    _
  $region21: #{basic_block_forward.2} parent=0 // pred_fallthru
    _

// kernel: basic_block_forward.3
$region0: #{basic_block_forward.3}
  #allocation0 [shape = 'u32[]', space=smem, size = 0x4, offset = 0x4, fixed_abs, tag = 'smem constant byte address 0x4 - core index']
  #allocation1 [shape = 'u32[144,128]{1,0:T(1,128)}', space=vmem, size = 0x12000, scoped, tag = 'internal scratch']
  %s0 = inlined_call_operand.vmem [shape: bf16[128,1280], index: 0, kind: input, shape index: {}]
  %s1 = inlined_call_operand.vmem [shape: bf16[1280,128], index: 1, kind: input, shape index: {}]
  %s2 = inlined_call_operand.vmem [shape: f32[1,128], index: 2, kind: input, shape index: {}]
  %s3 = inlined_call_operand.vmem [shape: f32[128,128], index: 3, kind: output, shape index: {}]
  %s4 = sld [smem:[#allocation0]]
  $region22: #{basic_block_forward.3} parent=0
    _
  %s6 = ssub.s32 1, %s4
  %s7 = scalar_select 0, %s6, %s4
  // Predicated region
  $region2: #{basic_block_forward.3} parent=0 // pred_check
    _
  $region3: #{basic_block_forward.3} parent=0 // pred_check_branch
    %9 = sbr.rel (0) target = $region5
  $region4: #{basic_block_forward.3} parent=0 // pred_region
    _
  $region5: #{basic_block_forward.3} parent=0 // pred_fallthru
    _
  // Predicated region
  $region6: #{basic_block_forward.3} parent=0 // pred_check
    _
  $region7: #{basic_block_forward.3} parent=0 // pred_check_branch
    %11 = sbr.rel (0) target = $region9
  $region8: #{basic_block_forward.3} parent=0 // pred_region
    _
  $region9: #{basic_block_forward.3} parent=0 // pred_fallthru
    _
  // Predicated region
  $region10: #{basic_block_forward.3} parent=0 // pred_check
    _
  $region11: #{basic_block_forward.3} parent=0 // pred_check_branch
    %13 = sbr.rel (0) target = $region13
  $region12: #{basic_block_forward.3} parent=0 // pred_region
    _
  $region13: #{basic_block_forward.3} parent=0 // pred_fallthru
    _
  %v15 = vld [vmem:[%s0] sm:$0xff]
  %v16 = vld [vmem:[%s0 + $0x8] sm:$0xff]
  %v17 = vld [vmem:[%s0 + $0x10] sm:$0xff]
  %v18 = vld [vmem:[%s0 + $0x18] sm:$0xff]
  %v19 = vld [vmem:[%s0 + $0x20] sm:$0xff]
  %v20 = vld [vmem:[%s0 + $0x28] sm:$0xff]
  %v21 = vld [vmem:[%s0 + $0x30] sm:$0xff]
  %v22 = vld [vmem:[%s0 + $0x38] sm:$0xff]
  %v23 = vld [vmem:[%s0 + $0x40] sm:$0xff]
  %v24 = vld [vmem:[%s0 + $0x48] sm:$0xff]
  %v25 = vld [vmem:[%s0 + $0x50] sm:$0xff]
  %v26 = vld [vmem:[%s0 + $0x58] sm:$0xff]
  %v27 = vld [vmem:[%s0 + $0x60] sm:$0xff]
  %v28 = vld [vmem:[%s0 + $0x68] sm:$0xff]
  %v29 = vld [vmem:[%s0 + $0x70] sm:$0xff]
  %v30 = vld [vmem:[%s0 + $0x78] sm:$0xff]
  %v31 = vld [vmem:[%s0 + $0x80] sm:$0xff]
  %v32 = vld [vmem:[%s0 + $0x88] sm:$0xff]
  %v33 = vld [vmem:[%s0 + $0x90] sm:$0xff]
  %v34 = vld [vmem:[%s0 + $0x98] sm:$0xff]
  %v35 = vld [vmem:[%s0 + $0xa0] sm:$0xff]
  %v36 = vld [vmem:[%s0 + $0xa8] sm:$0xff]
  %v37 = vld [vmem:[%s0 + $0xb0] sm:$0xff]
  %v38 = vld [vmem:[%s0 + $0xb8] sm:$0xff]
  %v39 = vld [vmem:[%s0 + $0xc0] sm:$0xff]
  %v40 = vld [vmem:[%s0 + $0xc8] sm:$0xff]
  %v41 = vld [vmem:[%s0 + $0xd0] sm:$0xff]
  %v42 = vld [vmem:[%s0 + $0xd8] sm:$0xff]
  %v43 = vld [vmem:[%s0 + $0xe0] sm:$0xff]
  %v44 = vld [vmem:[%s0 + $0xe8] sm:$0xff]
  %v45 = vld [vmem:[%s0 + $0xf0] sm:$0xff]
  %v46 = vld [vmem:[%s0 + $0xf8] sm:$0xff]
  %v47 = vld [vmem:[%s0 + $0x100] sm:$0xff]
  %v48 = vld [vmem:[%s0 + $0x108] sm:$0xff]
  %v49 = vld [vmem:[%s0 + $0x110] sm:$0xff]
  %v50 = vld [vmem:[%s0 + $0x118] sm:$0xff]
  %v51 = vld [vmem:[%s0 + $0x120] sm:$0xff]
  %v52 = vld [vmem:[%s0 + $0x128] sm:$0xff]
  %v53 = vld [vmem:[%s0 + $0x130] sm:$0xff]
  %v54 = vld [vmem:[%s0 + $0x138] sm:$0xff]
  %v55 = vld [vmem:[%s0 + $0x140] sm:$0xff]
  %v56 = vld [vmem:[%s0 + $0x148] sm:$0xff]
  %v57 = vld [vmem:[%s0 + $0x150] sm:$0xff]
  %v58 = vld [vmem:[%s0 + $0x158] sm:$0xff]
  %v59 = vld [vmem:[%s0 + $0x160] sm:$0xff]
  %v60 = vld [vmem:[%s0 + $0x168] sm:$0xff]
  %v61 = vld [vmem:[%s0 + $0x170] sm:$0xff]
  %v62 = vld [vmem:[%s0 + $0x178] sm:$0xff]
  %v63 = vld [vmem:[%s0 + $0x180] sm:$0xff]
  %v64 = vld [vmem:[%s0 + $0x188] sm:$0xff]
  %v65 = vld [vmem:[%s0 + $0x190] sm:$0xff]
  %v66 = vld [vmem:[%s0 + $0x198] sm:$0xff]
  %v67 = vld [vmem:[%s0 + $0x1a0] sm:$0xff]
  %v68 = vld [vmem:[%s0 + $0x1a8] sm:$0xff]
  %v69 = vld [vmem:[%s0 + $0x1b0] sm:$0xff]
  %v70 = vld [vmem:[%s0 + $0x1b8] sm:$0xff]
  %v71 = vld [vmem:[%s0 + $0x1c0] sm:$0xff]
  %v72 = vld [vmem:[%s0 + $0x1c8] sm:$0xff]
  %v73 = vld [vmem:[%s0 + $0x1d0] sm:$0xff]
  %v74 = vld [vmem:[%s0 + $0x1d8] sm:$0xff]
  %v75 = vld [vmem:[%s0 + $0x1e0] sm:$0xff]
  %v76 = vld [vmem:[%s0 + $0x1e8] sm:$0xff]
  %v77 = vld [vmem:[%s0 + $0x1f0] sm:$0xff]
  %v78 = vld [vmem:[%s0 + $0x1f8] sm:$0xff]
  %v79 = vld [vmem:[%s0 + $0x200] sm:$0xff]
  %v80 = vld [vmem:[%s0 + $0x208] sm:$0xff]
  %v81 = vld [vmem:[%s0 + $0x210] sm:$0xff]
  %v82 = vld [vmem:[%s0 + $0x218] sm:$0xff]
  %v83 = vld [vmem:[%s0 + $0x220] sm:$0xff]
  %v84 = vld [vmem:[%s0 + $0x228] sm:$0xff]
  %v85 = vld [vmem:[%s0 + $0x230] sm:$0xff]
  %v86 = vld [vmem:[%s0 + $0x238] sm:$0xff]
  %v87 = vld [vmem:[%s0 + $0x240] sm:$0xff]
  %v88 = vld [vmem:[%s0 + $0x248] sm:$0xff]
  %v89 = vld [vmem:[%s0 + $0x250] sm:$0xff]
  %v90 = vld [vmem:[%s0 + $0x258] sm:$0xff]
  %v91 = vld [vmem:[%s0 + $0x260] sm:$0xff]
  %v92 = vld [vmem:[%s0 + $0x268] sm:$0xff]
  %v93 = vld [vmem:[%s0 + $0x270] sm:$0xff]
  %v94 = vld [vmem:[%s0 + $0x278] sm:$0xff]
  %v95 = vld [vmem:[%s1] sm:$0xf]
  %v96 = vld [vmem:[%s1 + $0x4] sm:$0xf]
  %v97 = vld [vmem:[%s1 + $0x8] sm:$0xf]
  %v98 = vld [vmem:[%s1 + $0xc] sm:$0xf]
  %v99 = vld [vmem:[%s1 + $0x10] sm:$0xf]
  %v100 = vld [vmem:[%s1 + $0x14] sm:$0xf]
  %v101 = vld [vmem:[%s1 + $0x18] sm:$0xf]
  %v102 = vld [vmem:[%s1 + $0x1c] sm:$0xf]
  %v103 = vld [vmem:[%s1 + $0x20] sm:$0xf]
  %v104 = vld [vmem:[%s1 + $0x24] sm:$0xf]
  %v105 = vld [vmem:[%s1 + $0x28] sm:$0xf]
  %v106 = vld [vmem:[%s1 + $0x2c] sm:$0xf]
  %v107 = vld [vmem:[%s1 + $0x30] sm:$0xf]
  %v108 = vld [vmem:[%s1 + $0x34] sm:$0xf]
  %v109 = vld [vmem:[%s1 + $0x38] sm:$0xf]
  %v110 = vld [vmem:[%s1 + $0x3c] sm:$0xf]
  %v111 = vld [vmem:[%s1 + $0x40] sm:$0xf]
  %v112 = vld [vmem:[%s1 + $0x44] sm:$0xf]
  %v113 = vld [vmem:[%s1 + $0x48] sm:$0xf]
  %v114 = vld [vmem:[%s1 + $0x4c] sm:$0xf]
  %v115 = vld [vmem:[%s1 + $0x50] sm:$0xf]
  %v116 = vld [vmem:[%s1 + $0x54] sm:$0xf]
  %v117 = vld [vmem:[%s1 + $0x58] sm:$0xf]
  %v118 = vld [vmem:[%s1 + $0x5c] sm:$0xf]
  %v119 = vld [vmem:[%s1 + $0x60] sm:$0xf]
  %v120 = vld [vmem:[%s1 + $0x64] sm:$0xf]
  %v121 = vld [vmem:[%s1 + $0x68] sm:$0xf]
  %v122 = vld [vmem:[%s1 + $0x6c] sm:$0xf]
  %v123 = vld [vmem:[%s1 + $0x70] sm:$0xf]
  %v124 = vld [vmem:[%s1 + $0x74] sm:$0xf]
  %v125 = vld [vmem:[%s1 + $0x78] sm:$0xf]
  %v126 = vld [vmem:[%s1 + $0x7c] sm:$0xf]
  %v127 = vld [vmem:[%s1 + $0x80] sm:$0xf]
  %v128 = vld [vmem:[%s1 + $0x84] sm:$0xf]
  %v129 = vld [vmem:[%s1 + $0x88] sm:$0xf]
  %v130 = vld [vmem:[%s1 + $0x8c] sm:$0xf]
  %v131 = vld [vmem:[%s1 + $0x90] sm:$0xf]
  %v132 = vld [vmem:[%s1 + $0x94] sm:$0xf]
  %v133 = vld [vmem:[%s1 + $0x98] sm:$0xf]
  %v134 = vld [vmem:[%s1 + $0x9c] sm:$0xf]
  %v135 = vld [vmem:[%s1 + $0xa0] sm:$0xf]
  %v136 = vld [vmem:[%s1 + $0xa4] sm:$0xf]
  %v137 = vld [vmem:[%s1 + $0xa8] sm:$0xf]
  %v138 = vld [vmem:[%s1 + $0xac] sm:$0xf]
  %v139 = vld [vmem:[%s1 + $0xb0] sm:$0xf]
  %v140 = vld [vmem:[%s1 + $0xb4] sm:$0xf]
  %v141 = vld [vmem:[%s1 + $0xb8] sm:$0xf]
  %v142 = vld [vmem:[%s1 + $0xbc] sm:$0xf]
  %v143 = vld [vmem:[%s1 + $0xc0] sm:$0xf]
  %v144 = vld [vmem:[%s1 + $0xc4] sm:$0xf]
  %v145 = vld [vmem:[%s1 + $0xc8] sm:$0xf]
  %v146 = vld [vmem:[%s1 + $0xcc] sm:$0xf]
  %v147 = vld [vmem:[%s1 + $0xd0] sm:$0xf]
  %v148 = vld [vmem:[%s1 + $0xd4] sm:$0xf]
  %v149 = vld [vmem:[%s1 + $0xd8] sm:$0xf]
  %v150 = vld [vmem:[%s1 + $0xdc] sm:$0xf]
  %v151 = vld [vmem:[%s1 + $0xe0] sm:$0xf]
  %v152 = vld [vmem:[%s1 + $0xe4] sm:$0xf]
  %v153 = vld [vmem:[%s1 + $0xe8] sm:$0xf]
  %v154 = vld [vmem:[%s1 + $0xec] sm:$0xf]
  %v155 = vld [vmem:[%s1 + $0xf0] sm:$0xf]
  %v156 = vld [vmem:[%s1 + $0xf4] sm:$0xf]
  %v157 = vld [vmem:[%s1 + $0xf8] sm:$0xf]
  %v158 = vld [vmem:[%s1 + $0xfc] sm:$0xf]
  %v159 = vld [vmem:[%s1 + $0x100] sm:$0xf]
  %v160 = vld [vmem:[%s1 + $0x104] sm:$0xf]
  %v161 = vld [vmem:[%s1 + $0x108] sm:$0xf]
  %v162 = vld [vmem:[%s1 + $0x10c] sm:$0xf]
  %v163 = vld [vmem:[%s1 + $0x110] sm:$0xf]
  %v164 = vld [vmem:[%s1 + $0x114] sm:$0xf]
  %v165 = vld [vmem:[%s1 + $0x118] sm:$0xf]
  %v166 = vld [vmem:[%s1 + $0x11c] sm:$0xf]
  %v167 = vld [vmem:[%s1 + $0x120] sm:$0xf]
  %v168 = vld [vmem:[%s1 + $0x124] sm:$0xf]
  %v169 = vld [vmem:[%s1 + $0x128] sm:$0xf]
  %v170 = vld [vmem:[%s1 + $0x12c] sm:$0xf]
  %v171 = vld [vmem:[%s1 + $0x130] sm:$0xf]
  %v172 = vld [vmem:[%s1 + $0x134] sm:$0xf]
  %v173 = vld [vmem:[%s1 + $0x138] sm:$0xf]
  %v174 = vld [vmem:[%s1 + $0x13c] sm:$0xf]
  %v175 = vld [vmem:[%s1 + $0x140] sm:$0xf]
  %v176 = vld [vmem:[%s1 + $0x144] sm:$0xf]
  %v177 = vld [vmem:[%s1 + $0x148] sm:$0xf]
  %v178 = vld [vmem:[%s1 + $0x14c] sm:$0xf]
  %v179 = vld [vmem:[%s1 + $0x150] sm:$0xf]
  %v180 = vld [vmem:[%s1 + $0x154] sm:$0xf]
  %v181 = vld [vmem:[%s1 + $0x158] sm:$0xf]
  %v182 = vld [vmem:[%s1 + $0x15c] sm:$0xf]
  %v183 = vld [vmem:[%s1 + $0x160] sm:$0xf]
  %v184 = vld [vmem:[%s1 + $0x164] sm:$0xf]
  %v185 = vld [vmem:[%s1 + $0x168] sm:$0xf]
  %v186 = vld [vmem:[%s1 + $0x16c] sm:$0xf]
  %v187 = vld [vmem:[%s1 + $0x170] sm:$0xf]
  %v188 = vld [vmem:[%s1 + $0x174] sm:$0xf]
  %v189 = vld [vmem:[%s1 + $0x178] sm:$0xf]
  %v190 = vld [vmem:[%s1 + $0x17c] sm:$0xf]
  %v191 = vld [vmem:[%s1 + $0x180] sm:$0xf]
  %v192 = vld [vmem:[%s1 + $0x184] sm:$0xf]
  %v193 = vld [vmem:[%s1 + $0x188] sm:$0xf]
  %v194 = vld [vmem:[%s1 + $0x18c] sm:$0xf]
  %v195 = vld [vmem:[%s1 + $0x190] sm:$0xf]
  %v196 = vld [vmem:[%s1 + $0x194] sm:$0xf]
  %v197 = vld [vmem:[%s1 + $0x198] sm:$0xf]
  %v198 = vld [vmem:[%s1 + $0x19c] sm:$0xf]
  %v199 = vld [vmem:[%s1 + $0x1a0] sm:$0xf]
  %v200 = vld [vmem:[%s1 + $0x1a4] sm:$0xf]
  %v201 = vld [vmem:[%s1 + $0x1a8] sm:$0xf]
  %v202 = vld [vmem:[%s1 + $0x1ac] sm:$0xf]
  %v203 = vld [vmem:[%s1 + $0x1b0] sm:$0xf]
  %v204 = vld [vmem:[%s1 + $0x1b4] sm:$0xf]
  %v205 = vld [vmem:[%s1 + $0x1b8] sm:$0xf]
  %v206 = vld [vmem:[%s1 + $0x1bc] sm:$0xf]
  %v207 = vld [vmem:[%s1 + $0x1c0] sm:$0xf]
  %v208 = vld [vmem:[%s1 + $0x1c4] sm:$0xf]
  %v209 = vld [vmem:[%s1 + $0x1c8] sm:$0xf]
  %v210 = vld [vmem:[%s1 + $0x1cc] sm:$0xf]
  %v211 = vld [vmem:[%s1 + $0x1d0] sm:$0xf]
  %v212 = vld [vmem:[%s1 + $0x1d4] sm:$0xf]
  %v213 = vld [vmem:[%s1 + $0x1d8] sm:$0xf]
  %v214 = vld [vmem:[%s1 + $0x1dc] sm:$0xf]
  %v215 = vld [vmem:[%s1 + $0x1e0] sm:$0xf]
  %v216 = vld [vmem:[%s1 + $0x1e4] sm:$0xf]
  %v217 = vld [vmem:[%s1 + $0x1e8] sm:$0xf]
  %v218 = vld [vmem:[%s1 + $0x1ec] sm:$0xf]
  %v219 = vld [vmem:[%s1 + $0x1f0] sm:$0xf]
  %v220 = vld [vmem:[%s1 + $0x1f4] sm:$0xf]
  %v221 = vld [vmem:[%s1 + $0x1f8] sm:$0xf]
  %v222 = vld [vmem:[%s1 + $0x1fc] sm:$0xf]
  %v223 = vld [vmem:[%s1 + $0x200] sm:$0xf]
  %v224 = vld [vmem:[%s1 + $0x204] sm:$0xf]
  %v225 = vld [vmem:[%s1 + $0x208] sm:$0xf]
  %v226 = vld [vmem:[%s1 + $0x20c] sm:$0xf]
  %v227 = vld [vmem:[%s1 + $0x210] sm:$0xf]
  %v228 = vld [vmem:[%s1 + $0x214] sm:$0xf]
  %v229 = vld [vmem:[%s1 + $0x218] sm:$0xf]
  %v230 = vld [vmem:[%s1 + $0x21c] sm:$0xf]
  %v231 = vld [vmem:[%s1 + $0x220] sm:$0xf]
  %v232 = vld [vmem:[%s1 + $0x224] sm:$0xf]
  %v233 = vld [vmem:[%s1 + $0x228] sm:$0xf]
  %v234 = vld [vmem:[%s1 + $0x22c] sm:$0xf]
  %v235 = vld [vmem:[%s1 + $0x230] sm:$0xf]
  %v236 = vld [vmem:[%s1 + $0x234] sm:$0xf]
  %v237 = vld [vmem:[%s1 + $0x238] sm:$0xf]
  %v238 = vld [vmem:[%s1 + $0x23c] sm:$0xf]
  %v239 = vld [vmem:[%s1 + $0x240] sm:$0xf]
  %v240 = vld [vmem:[%s1 + $0x244] sm:$0xf]
  %v241 = vld [vmem:[%s1 + $0x248] sm:$0xf]
  %v242 = vld [vmem:[%s1 + $0x24c] sm:$0xf]
  %v243 = vld [vmem:[%s1 + $0x250] sm:$0xf]
  %v244 = vld [vmem:[%s1 + $0x254] sm:$0xf]
  %v245 = vld [vmem:[%s1 + $0x258] sm:$0xf]
  %v246 = vld [vmem:[%s1 + $0x25c] sm:$0xf]
  %v247 = vld [vmem:[%s1 + $0x260] sm:$0xf]
  %v248 = vld [vmem:[%s1 + $0x264] sm:$0xf]
  %v249 = vld [vmem:[%s1 + $0x268] sm:$0xf]
  %v250 = vld [vmem:[%s1 + $0x26c] sm:$0xf]
  %v251 = vld [vmem:[%s1 + $0x270] sm:$0xf]
  %v252 = vld [vmem:[%s1 + $0x274] sm:$0xf]
  %v253 = vld [vmem:[%s1 + $0x278] sm:$0xf]
  %v254 = vld [vmem:[%s1 + $0x27c] sm:$0xf]
  %v255 = vld [vmem:[%s2] sm:$0x1]
  %v257 = vlaneseq
  %v258 = vshrl.u32 %v257, 7
  %v259 = vsub.s32 0, %v258
  %v260 = vrot.slane %v255, %v259
  %v342 = vunpack.c.l.b16 %v15
  %v343 = vunpack.c.h.b16 %v15
  %v344 = vunpack.c.l.b16 %v16
  %v345 = vunpack.c.h.b16 %v16
  %v346 = vunpack.c.l.b16 %v17
  %v347 = vunpack.c.h.b16 %v17
  %v348 = vunpack.c.l.b16 %v18
  %v349 = vunpack.c.h.b16 %v18
  %v350 = vunpack.c.l.b16 %v19
  %v351 = vunpack.c.h.b16 %v19
  %v352 = vunpack.c.l.b16 %v20
  %v353 = vunpack.c.h.b16 %v20
  %v354 = vunpack.c.l.b16 %v21
  %v355 = vunpack.c.h.b16 %v21
  %v356 = vunpack.c.l.b16 %v22
  %v357 = vunpack.c.h.b16 %v22
  %v358 = vunpack.c.l.b16 %v23
  %v359 = vunpack.c.h.b16 %v23
  %v360 = vunpack.c.l.b16 %v24
  %v361 = vunpack.c.h.b16 %v24
  %v362 = vunpack.c.l.b16 %v25
  %v363 = vunpack.c.h.b16 %v25
  %v364 = vunpack.c.l.b16 %v26
  %v365 = vunpack.c.h.b16 %v26
  %v366 = vunpack.c.l.b16 %v27
  %v367 = vunpack.c.h.b16 %v27
  %v368 = vunpack.c.l.b16 %v28
  %v369 = vunpack.c.h.b16 %v28
  %v370 = vunpack.c.l.b16 %v29
  %v371 = vunpack.c.h.b16 %v29
  %v372 = vunpack.c.l.b16 %v30
  %v373 = vunpack.c.h.b16 %v30
  %v374 = vunpack.c.l.b16 %v31
  %v375 = vunpack.c.h.b16 %v31
  %v376 = vunpack.c.l.b16 %v32
  %v377 = vunpack.c.h.b16 %v32
  %v378 = vunpack.c.l.b16 %v33
  %v379 = vunpack.c.h.b16 %v33
  %v380 = vunpack.c.l.b16 %v34
  %v381 = vunpack.c.h.b16 %v34
  %v382 = vunpack.c.l.b16 %v35
  %v383 = vunpack.c.h.b16 %v35
  %v384 = vunpack.c.l.b16 %v36
  %v385 = vunpack.c.h.b16 %v36
  %v386 = vunpack.c.l.b16 %v37
  %v387 = vunpack.c.h.b16 %v37
  %v388 = vunpack.c.l.b16 %v38
  %v389 = vunpack.c.h.b16 %v38
  %v390 = vunpack.c.l.b16 %v39
  %v391 = vunpack.c.h.b16 %v39
  %v392 = vunpack.c.l.b16 %v40
  %v393 = vunpack.c.h.b16 %v40
  %v394 = vunpack.c.l.b16 %v41
  %v395 = vunpack.c.h.b16 %v41
  %v396 = vunpack.c.l.b16 %v42
  %v397 = vunpack.c.h.b16 %v42
  %v398 = vunpack.c.l.b16 %v43
  %v399 = vunpack.c.h.b16 %v43
  %v400 = vunpack.c.l.b16 %v44
  %v401 = vunpack.c.h.b16 %v44
  %v402 = vunpack.c.l.b16 %v45
  %v403 = vunpack.c.h.b16 %v45
  %v404 = vunpack.c.l.b16 %v46
  %v405 = vunpack.c.h.b16 %v46
  %v406 = vunpack.c.l.b16 %v47
  %v407 = vunpack.c.h.b16 %v47
  %v408 = vunpack.c.l.b16 %v48
  %v409 = vunpack.c.h.b16 %v48
  %v410 = vunpack.c.l.b16 %v49
  %v411 = vunpack.c.h.b16 %v49
  %v412 = vunpack.c.l.b16 %v50
  %v413 = vunpack.c.h.b16 %v50
  %v414 = vunpack.c.l.b16 %v51
  %v415 = vunpack.c.h.b16 %v51
  %v416 = vunpack.c.l.b16 %v52
  %v417 = vunpack.c.h.b16 %v52
  %v418 = vunpack.c.l.b16 %v53
  %v419 = vunpack.c.h.b16 %v53
  %v420 = vunpack.c.l.b16 %v54
  %v421 = vunpack.c.h.b16 %v54
  %v422 = vunpack.c.l.b16 %v55
  %v423 = vunpack.c.h.b16 %v55
  %v424 = vunpack.c.l.b16 %v56
  %v425 = vunpack.c.h.b16 %v56
  %v426 = vunpack.c.l.b16 %v57
  %v427 = vunpack.c.h.b16 %v57
  %v428 = vunpack.c.l.b16 %v58
  %v429 = vunpack.c.h.b16 %v58
  %v430 = vunpack.c.l.b16 %v59
  %v431 = vunpack.c.h.b16 %v59
  %v432 = vunpack.c.l.b16 %v60
  %v433 = vunpack.c.h.b16 %v60
  %v434 = vunpack.c.l.b16 %v61
  %v435 = vunpack.c.h.b16 %v61
  %v436 = vunpack.c.l.b16 %v62
  %v437 = vunpack.c.h.b16 %v62
  %v438 = vunpack.c.l.b16 %v63
  %v439 = vunpack.c.h.b16 %v63
  %v440 = vunpack.c.l.b16 %v64
  %v441 = vunpack.c.h.b16 %v64
  %v442 = vunpack.c.l.b16 %v65
  %v443 = vunpack.c.h.b16 %v65
  %v444 = vunpack.c.l.b16 %v66
  %v445 = vunpack.c.h.b16 %v66
  %v446 = vunpack.c.l.b16 %v67
  %v447 = vunpack.c.h.b16 %v67
  %v448 = vunpack.c.l.b16 %v68
  %v449 = vunpack.c.h.b16 %v68
  %v450 = vunpack.c.l.b16 %v69
  %v451 = vunpack.c.h.b16 %v69
  %v452 = vunpack.c.l.b16 %v70
  %v453 = vunpack.c.h.b16 %v70
  %v454 = vunpack.c.l.b16 %v71
  %v455 = vunpack.c.h.b16 %v71
  %v456 = vunpack.c.l.b16 %v72
  %v457 = vunpack.c.h.b16 %v72
  %v458 = vunpack.c.l.b16 %v73
  %v459 = vunpack.c.h.b16 %v73
  %v460 = vunpack.c.l.b16 %v74
  %v461 = vunpack.c.h.b16 %v74
  %v462 = vunpack.c.l.b16 %v75
  %v463 = vunpack.c.h.b16 %v75
  %v464 = vunpack.c.l.b16 %v76
  %v465 = vunpack.c.h.b16 %v76
  %v466 = vunpack.c.l.b16 %v77
  %v467 = vunpack.c.h.b16 %v77
  %v468 = vunpack.c.l.b16 %v78
  %v469 = vunpack.c.h.b16 %v78
  %v470 = vunpack.c.l.b16 %v79
  %v471 = vunpack.c.h.b16 %v79
  %v472 = vunpack.c.l.b16 %v80
  %v473 = vunpack.c.h.b16 %v80
  %v474 = vunpack.c.l.b16 %v81
  %v475 = vunpack.c.h.b16 %v81
  %v476 = vunpack.c.l.b16 %v82
  %v477 = vunpack.c.h.b16 %v82
  %v478 = vunpack.c.l.b16 %v83
  %v479 = vunpack.c.h.b16 %v83
  %v480 = vunpack.c.l.b16 %v84
  %v481 = vunpack.c.h.b16 %v84
  %v482 = vunpack.c.l.b16 %v85
  %v483 = vunpack.c.h.b16 %v85
  %v484 = vunpack.c.l.b16 %v86
  %v485 = vunpack.c.h.b16 %v86
  %v486 = vunpack.c.l.b16 %v87
  %v487 = vunpack.c.h.b16 %v87
  %v488 = vunpack.c.l.b16 %v88
  %v489 = vunpack.c.h.b16 %v88
  %v490 = vunpack.c.l.b16 %v89
  %v491 = vunpack.c.h.b16 %v89
  %v492 = vunpack.c.l.b16 %v90
  %v493 = vunpack.c.h.b16 %v90
  %v494 = vunpack.c.l.b16 %v91
  %v495 = vunpack.c.h.b16 %v91
  %v496 = vunpack.c.l.b16 %v92
  %v497 = vunpack.c.h.b16 %v92
  %v498 = vunpack.c.l.b16 %v93
  %v499 = vunpack.c.h.b16 %v93
  %v500 = vunpack.c.l.b16 %v94
  %v501 = vunpack.c.h.b16 %v94
  %v502 = vpack.c.b16 %v352, %v342
  %v503 = vpack.c.b16 %v353, %v343
  %v504 = vpack.c.b16 %v354, %v344
  %v505 = vpack.c.b16 %v355, %v345
  %v506 = vpack.c.b16 %v356, %v346
  %v507 = vpack.c.b16 %v357, %v347
  %v508 = vpack.c.b16 %v358, %v348
  %v509 = vpack.c.b16 %v359, %v349
  %v510 = vpack.c.b16 %v360, %v350
  %v511 = vpack.c.b16 %v361, %v351
  %v512 = vpack.c.b16 %v372, %v362
  %v513 = vpack.c.b16 %v373, %v363
  %v514 = vpack.c.b16 %v374, %v364
  %v515 = vpack.c.b16 %v375, %v365
  %v516 = vpack.c.b16 %v376, %v366
  %v517 = vpack.c.b16 %v377, %v367
  %v518 = vpack.c.b16 %v378, %v368
  %v519 = vpack.c.b16 %v379, %v369
  %v520 = vpack.c.b16 %v380, %v370
  %v521 = vpack.c.b16 %v381, %v371
  %v522 = vpack.c.b16 %v392, %v382
  %v523 = vpack.c.b16 %v393, %v383
  %v524 = vpack.c.b16 %v394, %v384
  %v525 = vpack.c.b16 %v395, %v385
  %v526 = vpack.c.b16 %v396, %v386
  %v527 = vpack.c.b16 %v397, %v387
  %v528 = vpack.c.b16 %v398, %v388
  %v529 = vpack.c.b16 %v399, %v389
  %v530 = vpack.c.b16 %v400, %v390
  %v531 = vpack.c.b16 %v401, %v391
  %v532 = vpack.c.b16 %v412, %v402
  %v533 = vpack.c.b16 %v413, %v403
  %v534 = vpack.c.b16 %v414, %v404
  %v535 = vpack.c.b16 %v415, %v405
  %v536 = vpack.c.b16 %v416, %v406
  %v537 = vpack.c.b16 %v417, %v407
  %v538 = vpack.c.b16 %v418, %v408
  %v539 = vpack.c.b16 %v419, %v409
  %v540 = vpack.c.b16 %v420, %v410
  %v541 = vpack.c.b16 %v421, %v411
  %v542 = vpack.c.b16 %v432, %v422
  %v543 = vpack.c.b16 %v433, %v423
  %v544 = vpack.c.b16 %v434, %v424
  %v545 = vpack.c.b16 %v435, %v425
  %v546 = vpack.c.b16 %v436, %v426
  %v547 = vpack.c.b16 %v437, %v427
  %v548 = vpack.c.b16 %v438, %v428
  %v549 = vpack.c.b16 %v439, %v429
  %v550 = vpack.c.b16 %v440, %v430
  %v551 = vpack.c.b16 %v441, %v431
  %v552 = vpack.c.b16 %v452, %v442
  %v553 = vpack.c.b16 %v453, %v443
  %v554 = vpack.c.b16 %v454, %v444
  %v555 = vpack.c.b16 %v455, %v445
  %v556 = vpack.c.b16 %v456, %v446
  %v557 = vpack.c.b16 %v457, %v447
  %v558 = vpack.c.b16 %v458, %v448
  %v559 = vpack.c.b16 %v459, %v449
  %v560 = vpack.c.b16 %v460, %v450
  %v561 = vpack.c.b16 %v461, %v451
  %v562 = vpack.c.b16 %v472, %v462
  %v563 = vpack.c.b16 %v473, %v463
  %v564 = vpack.c.b16 %v474, %v464
  %v565 = vpack.c.b16 %v475, %v465
  %v566 = vpack.c.b16 %v476, %v466
  %v567 = vpack.c.b16 %v477, %v467
  %v568 = vpack.c.b16 %v478, %v468
  %v569 = vpack.c.b16 %v479, %v469
  %v570 = vpack.c.b16 %v480, %v470
  %v571 = vpack.c.b16 %v481, %v471
  %v572 = vpack.c.b16 %v492, %v482
  %v573 = vpack.c.b16 %v493, %v483
  %v574 = vpack.c.b16 %v494, %v484
  %v575 = vpack.c.b16 %v495, %v485
  %v576 = vpack.c.b16 %v496, %v486
  %v577 = vpack.c.b16 %v497, %v487
  %v578 = vpack.c.b16 %v498, %v488
  %v579 = vpack.c.b16 %v499, %v489
  %v580 = vpack.c.b16 %v500, %v490
  %v581 = vpack.c.b16 %v501, %v491
  %v822 = vunpack.c.l.b16 %v95
  %v823 = vunpack.c.l.b16 %v96
  %v824 = vunpack.c.l.b16 %v97
  %v825 = vunpack.c.l.b16 %v98
  %v826 = vunpack.c.l.b16 %v99
  %v827 = vunpack.c.l.b16 %v100
  %v828 = vunpack.c.l.b16 %v101
  %v829 = vunpack.c.l.b16 %v102
  %v830 = vunpack.c.l.b16 %v103
  %v831 = vunpack.c.l.b16 %v104
  %v832 = vunpack.c.l.b16 %v105
  %v833 = vunpack.c.l.b16 %v106
  %v834 = vunpack.c.l.b16 %v107
  %v835 = vunpack.c.l.b16 %v108
  %v836 = vunpack.c.l.b16 %v109
  %v837 = vunpack.c.l.b16 %v110
  %v838 = vunpack.c.l.b16 %v111
  %v839 = vunpack.c.l.b16 %v112
  %v840 = vunpack.c.l.b16 %v113
  %v841 = vunpack.c.l.b16 %v114
  %v842 = vunpack.c.l.b16 %v115
  %v843 = vunpack.c.l.b16 %v116
  %v844 = vunpack.c.l.b16 %v117
  %v845 = vunpack.c.l.b16 %v118
  %v846 = vunpack.c.l.b16 %v119
  %v847 = vunpack.c.l.b16 %v120
  %v848 = vunpack.c.l.b16 %v121
  %v849 = vunpack.c.l.b16 %v122
  %v850 = vunpack.c.l.b16 %v123
  %v851 = vunpack.c.l.b16 %v124
  %v852 = vunpack.c.l.b16 %v125
  %v853 = vunpack.c.l.b16 %v126
  %v854 = vunpack.c.l.b16 %v127
  %v855 = vunpack.c.l.b16 %v128
  %v856 = vunpack.c.l.b16 %v129
  %v857 = vunpack.c.l.b16 %v130
  %v858 = vunpack.c.l.b16 %v131
  %v859 = vunpack.c.l.b16 %v132
  %v860 = vunpack.c.l.b16 %v133
  %v861 = vunpack.c.l.b16 %v134
  %v862 = vunpack.c.l.b16 %v135
  %v863 = vunpack.c.l.b16 %v136
  %v864 = vunpack.c.l.b16 %v137
  %v865 = vunpack.c.l.b16 %v138
  %v866 = vunpack.c.l.b16 %v139
  %v867 = vunpack.c.l.b16 %v140
  %v868 = vunpack.c.l.b16 %v141
  %v869 = vunpack.c.l.b16 %v142
  %v870 = vunpack.c.l.b16 %v143
  %v871 = vunpack.c.l.b16 %v144
  %v872 = vunpack.c.l.b16 %v145
  %v873 = vunpack.c.l.b16 %v146
  %v874 = vunpack.c.l.b16 %v147
  %v875 = vunpack.c.l.b16 %v148
  %v876 = vunpack.c.l.b16 %v149
  %v877 = vunpack.c.l.b16 %v150
  %v878 = vunpack.c.l.b16 %v151
  %v879 = vunpack.c.l.b16 %v152
  %v880 = vunpack.c.l.b16 %v153
  %v881 = vunpack.c.l.b16 %v154
  %v882 = vunpack.c.l.b16 %v155
  %v883 = vunpack.c.l.b16 %v156
  %v884 = vunpack.c.l.b16 %v157
  %v885 = vunpack.c.l.b16 %v158
  %v886 = vunpack.c.l.b16 %v159
  %v887 = vunpack.c.l.b16 %v160
  %v888 = vunpack.c.l.b16 %v161
  %v889 = vunpack.c.l.b16 %v162
  %v890 = vunpack.c.l.b16 %v163
  %v891 = vunpack.c.l.b16 %v164
  %v892 = vunpack.c.l.b16 %v165
  %v893 = vunpack.c.l.b16 %v166
  %v894 = vunpack.c.l.b16 %v167
  %v895 = vunpack.c.l.b16 %v168
  %v896 = vunpack.c.l.b16 %v169
  %v897 = vunpack.c.l.b16 %v170
  %v898 = vunpack.c.l.b16 %v171
  %v899 = vunpack.c.l.b16 %v172
  %v900 = vunpack.c.l.b16 %v173
  %v901 = vunpack.c.l.b16 %v174
  %v902 = vunpack.c.l.b16 %v175
  %v903 = vunpack.c.l.b16 %v176
  %v904 = vunpack.c.l.b16 %v177
  %v905 = vunpack.c.l.b16 %v178
  %v906 = vunpack.c.l.b16 %v179
  %v907 = vunpack.c.l.b16 %v180
  %v908 = vunpack.c.l.b16 %v181
  %v909 = vunpack.c.l.b16 %v182
  %v910 = vunpack.c.l.b16 %v183
  %v911 = vunpack.c.l.b16 %v184
  %v912 = vunpack.c.l.b16 %v185
  %v913 = vunpack.c.l.b16 %v186
  %v914 = vunpack.c.l.b16 %v187
  %v915 = vunpack.c.l.b16 %v188
  %v916 = vunpack.c.l.b16 %v189
  %v917 = vunpack.c.l.b16 %v190
  %v918 = vunpack.c.l.b16 %v191
  %v919 = vunpack.c.l.b16 %v192
  %v920 = vunpack.c.l.b16 %v193
  %v921 = vunpack.c.l.b16 %v194
  %v922 = vunpack.c.l.b16 %v195
  %v923 = vunpack.c.l.b16 %v196
  %v924 = vunpack.c.l.b16 %v197
  %v925 = vunpack.c.l.b16 %v198
  %v926 = vunpack.c.l.b16 %v199
  %v927 = vunpack.c.l.b16 %v200
  %v928 = vunpack.c.l.b16 %v201
  %v929 = vunpack.c.l.b16 %v202
  %v930 = vunpack.c.l.b16 %v203
  %v931 = vunpack.c.l.b16 %v204
  %v932 = vunpack.c.l.b16 %v205
  %v933 = vunpack.c.l.b16 %v206
  %v934 = vunpack.c.l.b16 %v207
  %v935 = vunpack.c.l.b16 %v208
  %v936 = vunpack.c.l.b16 %v209
  %v937 = vunpack.c.l.b16 %v210
  %v938 = vunpack.c.l.b16 %v211
  %v939 = vunpack.c.l.b16 %v212
  %v940 = vunpack.c.l.b16 %v213
  %v941 = vunpack.c.l.b16 %v214
  %v942 = vunpack.c.l.b16 %v215
  %v943 = vunpack.c.l.b16 %v216
  %v944 = vunpack.c.l.b16 %v217
  %v945 = vunpack.c.l.b16 %v218
  %v946 = vunpack.c.l.b16 %v219
  %v947 = vunpack.c.l.b16 %v220
  %v948 = vunpack.c.l.b16 %v221
  %v949 = vunpack.c.l.b16 %v222
  %v950 = vunpack.c.l.b16 %v223
  %v951 = vunpack.c.l.b16 %v224
  %v952 = vunpack.c.l.b16 %v225
  %v953 = vunpack.c.l.b16 %v226
  %v954 = vunpack.c.l.b16 %v227
  %v955 = vunpack.c.l.b16 %v228
  %v956 = vunpack.c.l.b16 %v229
  %v957 = vunpack.c.l.b16 %v230
  %v958 = vunpack.c.l.b16 %v231
  %v959 = vunpack.c.l.b16 %v232
  %v960 = vunpack.c.l.b16 %v233
  %v961 = vunpack.c.l.b16 %v234
  %v962 = vunpack.c.l.b16 %v235
  %v963 = vunpack.c.l.b16 %v236
  %v964 = vunpack.c.l.b16 %v237
  %v965 = vunpack.c.l.b16 %v238
  %v966 = vunpack.c.l.b16 %v239
  %v967 = vunpack.c.l.b16 %v240
  %v968 = vunpack.c.l.b16 %v241
  %v969 = vunpack.c.l.b16 %v242
  %v970 = vunpack.c.l.b16 %v243
  %v971 = vunpack.c.l.b16 %v244
  %v972 = vunpack.c.l.b16 %v245
  %v973 = vunpack.c.l.b16 %v246
  %v974 = vunpack.c.l.b16 %v247
  %v975 = vunpack.c.l.b16 %v248
  %v976 = vunpack.c.l.b16 %v249
  %v977 = vunpack.c.l.b16 %v250
  %v978 = vunpack.c.l.b16 %v251
  %v979 = vunpack.c.l.b16 %v252
  %v980 = vunpack.c.l.b16 %v253
  %v981 = vunpack.c.l.b16 %v254
  %v982 = vpack.c.b16 %v823, %v822
  %v983 = vpack.c.b16 %v825, %v824
  %v984 = vpack.c.b16 %v827, %v826
  %v985 = vpack.c.b16 %v829, %v828
  %v986 = vpack.c.b16 %v831, %v830
  %v987 = vpack.c.b16 %v833, %v832
  %v988 = vpack.c.b16 %v835, %v834
  %v989 = vpack.c.b16 %v837, %v836
  %v990 = vpack.c.b16 %v839, %v838
  %v991 = vpack.c.b16 %v841, %v840
  %v992 = vpack.c.b16 %v843, %v842
  %v993 = vpack.c.b16 %v845, %v844
  %v994 = vpack.c.b16 %v847, %v846
  %v995 = vpack.c.b16 %v849, %v848
  %v996 = vpack.c.b16 %v851, %v850
  %v997 = vpack.c.b16 %v853, %v852
  %v998 = vpack.c.b16 %v855, %v854
  %v999 = vpack.c.b16 %v857, %v856
  %v1000 = vpack.c.b16 %v859, %v858
  %v1001 = vpack.c.b16 %v861, %v860
  %v1002 = vpack.c.b16 %v863, %v862
  %v1003 = vpack.c.b16 %v865, %v864
  %v1004 = vpack.c.b16 %v867, %v866
  %v1005 = vpack.c.b16 %v869, %v868
  %v1006 = vpack.c.b16 %v871, %v870
  %v1007 = vpack.c.b16 %v873, %v872
  %v1008 = vpack.c.b16 %v875, %v874
  %v1009 = vpack.c.b16 %v877, %v876
  %v1010 = vpack.c.b16 %v879, %v878
  %v1011 = vpack.c.b16 %v881, %v880
  %v1012 = vpack.c.b16 %v883, %v882
  %v1013 = vpack.c.b16 %v885, %v884
  %v1014 = vpack.c.b16 %v887, %v886
  %v1015 = vpack.c.b16 %v889, %v888
  %v1016 = vpack.c.b16 %v891, %v890
  %v1017 = vpack.c.b16 %v893, %v892
  %v1018 = vpack.c.b16 %v895, %v894
  %v1019 = vpack.c.b16 %v897, %v896
  %v1020 = vpack.c.b16 %v899, %v898
  %v1021 = vpack.c.b16 %v901, %v900
  %v1022 = vpack.c.b16 %v903, %v902
  %v1023 = vpack.c.b16 %v905, %v904
  %v1024 = vpack.c.b16 %v907, %v906
  %v1025 = vpack.c.b16 %v909, %v908
  %v1026 = vpack.c.b16 %v911, %v910
  %v1027 = vpack.c.b16 %v913, %v912
  %v1028 = vpack.c.b16 %v915, %v914
  %v1029 = vpack.c.b16 %v917, %v916
  %v1030 = vpack.c.b16 %v919, %v918
  %v1031 = vpack.c.b16 %v921, %v920
  %v1032 = vpack.c.b16 %v923, %v922
  %v1033 = vpack.c.b16 %v925, %v924
  %v1034 = vpack.c.b16 %v927, %v926
  %v1035 = vpack.c.b16 %v929, %v928
  %v1036 = vpack.c.b16 %v931, %v930
  %v1037 = vpack.c.b16 %v933, %v932
  %v1038 = vpack.c.b16 %v935, %v934
  %v1039 = vpack.c.b16 %v937, %v936
  %v1040 = vpack.c.b16 %v939, %v938
  %v1041 = vpack.c.b16 %v941, %v940
  %v1042 = vpack.c.b16 %v943, %v942
  %v1043 = vpack.c.b16 %v945, %v944
  %v1044 = vpack.c.b16 %v947, %v946
  %v1045 = vpack.c.b16 %v949, %v948
  %v1046 = vpack.c.b16 %v951, %v950
  %v1047 = vpack.c.b16 %v953, %v952
  %v1048 = vpack.c.b16 %v955, %v954
  %v1049 = vpack.c.b16 %v957, %v956
  %v1050 = vpack.c.b16 %v959, %v958
  %v1051 = vpack.c.b16 %v961, %v960
  %v1052 = vpack.c.b16 %v963, %v962
  %v1053 = vpack.c.b16 %v965, %v964
  %v1054 = vpack.c.b16 %v967, %v966
  %v1055 = vpack.c.b16 %v969, %v968
  %v1056 = vpack.c.b16 %v971, %v970
  %v1057 = vpack.c.b16 %v973, %v972
  %v1058 = vpack.c.b16 %v975, %v974
  %v1059 = vpack.c.b16 %v977, %v976
  %v1060 = vpack.c.b16 %v979, %v978
  %v1061 = vpack.c.b16 %v981, %v980
  %1142 = vmatprep.subr.bf16.mxu0 0
  %1143 = vmatpush1.bf16.msra.mxu0 %v989
  %1144 = vmatprep.subr.bf16.mxu0 0
  %1145 = vmatpush1.bf16.msra.mxu0 %v988
  %1146 = vmatprep.subr.bf16.mxu0 0
  %1147 = vmatpush1.bf16.msra.mxu0 %v987
  %1148 = vmatprep.subr.bf16.mxu0 0
  %1149 = vmatpush1.bf16.msra.mxu0 %v986
  %1150 = vmatprep.subr.bf16.mxu0 0
  %1151 = vmatpush1.bf16.msra.mxu0 %v985
  %1152 = vmatprep.subr.bf16.mxu0 0
  %1153 = vmatpush1.bf16.msra.mxu0 %v984
  %1154 = vmatprep.subr.bf16.mxu0 0
  %1155 = vmatpush1.bf16.msra.mxu0 %v983
  %1156 = vmatprep.subr.bf16.mxu0 0
  %1157 = vmatpush1.bf16.msra.mxu0 %v982
  %1158 = vmatprep.subr.bf16.mxu0 0
  %1159 = vmatpush2.bf16.msra.mxu0 %v997
  %1160 = vmatprep.subr.bf16.mxu0 0
  %1161 = vmatpush2.bf16.msra.mxu0 %v996
  %1162 = vmatprep.subr.bf16.mxu0 0
  %1163 = vmatpush2.bf16.msra.mxu0 %v995
  %1164 = vmatprep.subr.bf16.mxu0 0
  %1165 = vmatpush2.bf16.msra.mxu0 %v994
  %1166 = vmatprep.subr.bf16.mxu0 0
  %1167 = vmatpush2.bf16.msra.mxu0 %v993
  %1168 = vmatprep.subr.bf16.mxu0 0
  %1169 = vmatpush2.bf16.msra.mxu0 %v992
  %1170 = vmatprep.subr.bf16.mxu0 0
  %1171 = vmatpush2.bf16.msra.mxu0 %v991
  %1172 = vmatprep.subr.bf16.mxu0 0
  %1173 = vmatpush2.bf16.msra.mxu0 %v990
  %1174 = vmatprep.mubr.bf16.mxu0 %v503
  %1175 = vmatmul.mubr.bf16.gmra.mxu0 %v502
  %v1176 = vpop.f32.mrf.mxu0
  %v1177 = vadd.f32 %v260, %v1176
  %v1178 = vpop.f32.mrf.mxu0
  %v1179 = vpop.f32.mrf.mxu0
  %v1180 = vadd.f32 %v260, %v1179
  %v1181 = vpop.f32.mrf.mxu0
  %1182 = vmatprep.mubr.bf16.mxu0 %v513
  %1183 = vmatmul.mubr.bf16.gmra.mxu0 %v512
  %v1184 = vpop.f32.mrf.mxu0
  %v1185 = vadd.f32 %v260, %v1184
  %v1186 = vpop.f32.mrf.mxu0
  %v1187 = vpop.f32.mrf.mxu0
  %v1188 = vadd.f32 %v260, %v1187
  %v1189 = vpop.f32.mrf.mxu0
  %1190 = vmatprep.mubr.bf16.mxu0 %v523
  %1191 = vmatmul.mubr.bf16.gmra.mxu0 %v522
  %v1192 = vpop.f32.mrf.mxu0
  %v1193 = vadd.f32 %v260, %v1192
  %v1194 = vpop.f32.mrf.mxu0
  %v1195 = vpop.f32.mrf.mxu0
  %v1196 = vadd.f32 %v260, %v1195
  %v1197 = vpop.f32.mrf.mxu0
  %1198 = vmatprep.mubr.bf16.mxu0 %v533
  %1199 = vmatmul.mubr.bf16.gmra.mxu0 %v532
  %v1200 = vpop.f32.mrf.mxu0
  %v1201 = vadd.f32 %v260, %v1200
  %v1202 = vpop.f32.mrf.mxu0
  %v1203 = vpop.f32.mrf.mxu0
  %v1204 = vadd.f32 %v260, %v1203
  %v1205 = vpop.f32.mrf.mxu0
  %1206 = vmatprep.mubr.bf16.mxu0 %v543
  %1207 = vmatmul.mubr.bf16.gmra.mxu0 %v542
  %v1208 = vpop.f32.mrf.mxu0
  %v1209 = vadd.f32 %v260, %v1208
  %v1210 = vpop.f32.mrf.mxu0
  %v1211 = vpop.f32.mrf.mxu0
  %v1212 = vadd.f32 %v260, %v1211
  %v1213 = vpop.f32.mrf.mxu0
  %1214 = vmatprep.mubr.bf16.mxu0 %v553
  %1215 = vmatmul.mubr.bf16.gmra.mxu0 %v552
  %v1216 = vpop.f32.mrf.mxu0
  %v1217 = vadd.f32 %v260, %v1216
  %v1218 = vpop.f32.mrf.mxu0
  %v1219 = vpop.f32.mrf.mxu0
  %v1220 = vadd.f32 %v260, %v1219
  %v1221 = vpop.f32.mrf.mxu0
  %1222 = vmatprep.mubr.bf16.mxu0 %v563
  %1223 = vmatmul.mubr.bf16.gmra.mxu0 %v562
  %v1224 = vpop.f32.mrf.mxu0
  %v1225 = vadd.f32 %v260, %v1224
  %v1226 = vpop.f32.mrf.mxu0
  %v1227 = vpop.f32.mrf.mxu0
  %v1228 = vadd.f32 %v260, %v1227
  %v1229 = vpop.f32.mrf.mxu0
  %1230 = vmatprep.mubr.bf16.mxu0 %v573
  %1231 = vmatmul.mubr.bf16.gmra.mxu0 %v572
  %v1232 = vpop.f32.mrf.mxu0
  %v1233 = vadd.f32 %v260, %v1232
  %v1234 = vpop.f32.mrf.mxu0
  %v1235 = vpop.f32.mrf.mxu0
  %v1236 = vadd.f32 %v260, %v1235
  %v1237 = vpop.f32.mrf.mxu0
  %1238 = vdwg.mxu0
  %1239 = vmatprep.subr.bf16.mxu0 0
  %1240 = vmatpush1.bf16.msra.mxu0 %v1005
  %1241 = vmatprep.subr.bf16.mxu0 0
  %1242 = vmatpush1.bf16.msra.mxu0 %v1004
  %1243 = vmatprep.subr.bf16.mxu0 0
  %1244 = vmatpush1.bf16.msra.mxu0 %v1003
  %1245 = vmatprep.subr.bf16.mxu0 0
  %1246 = vmatpush1.bf16.msra.mxu0 %v1002
  %1247 = vmatprep.subr.bf16.mxu0 0
  %1248 = vmatpush1.bf16.msra.mxu0 %v1001
  %1249 = vmatprep.subr.bf16.mxu0 0
  %1250 = vmatpush1.bf16.msra.mxu0 %v1000
  %1251 = vmatprep.subr.bf16.mxu0 0
  %1252 = vmatpush1.bf16.msra.mxu0 %v999
  %1253 = vmatprep.subr.bf16.mxu0 0
  %1254 = vmatpush1.bf16.msra.mxu0 %v998
  %1255 = vmatprep.subr.bf16.mxu0 0
  %1256 = vmatpush2.bf16.msra.mxu0 %v1013
  %1257 = vmatprep.subr.bf16.mxu0 0
  %1258 = vmatpush2.bf16.msra.mxu0 %v1012
  %1259 = vmatprep.subr.bf16.mxu0 0
  %1260 = vmatpush2.bf16.msra.mxu0 %v1011
  %1261 = vmatprep.subr.bf16.mxu0 0
  %1262 = vmatpush2.bf16.msra.mxu0 %v1010
  %1263 = vmatprep.subr.bf16.mxu0 0
  %1264 = vmatpush2.bf16.msra.mxu0 %v1009
  %1265 = vmatprep.subr.bf16.mxu0 0
  %1266 = vmatpush2.bf16.msra.mxu0 %v1008
  %1267 = vmatprep.subr.bf16.mxu0 0
  %1268 = vmatpush2.bf16.msra.mxu0 %v1007
  %1269 = vmatprep.subr.bf16.mxu0 0
  %1270 = vmatpush2.bf16.msra.mxu0 %v1006
  %1271 = vmatprep.mubr.bf16.mxu0 %v505
  %1272 = vmatmul.mubr.bf16.gmra.mxu0 %v504
  %v1273 = vpop.f32.mrf.mxu0
  %v1274 = vadd.f32 %v1177, %v1273
  %v1275 = vpop.f32.mrf.mxu0
  %v1276 = vpop.f32.mrf.mxu0
  %v1277 = vadd.f32 %v1180, %v1276
  %v1278 = vpop.f32.mrf.mxu0
  %1279 = vmatprep.mubr.bf16.mxu0 %v515
  %1280 = vmatmul.mubr.bf16.gmra.mxu0 %v514
  %v1281 = vpop.f32.mrf.mxu0
  %v1282 = vadd.f32 %v1185, %v1281
  %v1283 = vpop.f32.mrf.mxu0
  %v1284 = vpop.f32.mrf.mxu0
  %v1285 = vadd.f32 %v1188, %v1284
  %v1286 = vpop.f32.mrf.mxu0
  %1287 = vmatprep.mubr.bf16.mxu0 %v525
  %1288 = vmatmul.mubr.bf16.gmra.mxu0 %v524
  %v1289 = vpop.f32.mrf.mxu0
  %v1290 = vadd.f32 %v1193, %v1289
  %v1291 = vpop.f32.mrf.mxu0
  %v1292 = vpop.f32.mrf.mxu0
  %v1293 = vadd.f32 %v1196, %v1292
  %v1294 = vpop.f32.mrf.mxu0
  %1295 = vmatprep.mubr.bf16.mxu0 %v535
  %1296 = vmatmul.mubr.bf16.gmra.mxu0 %v534
  %v1297 = vpop.f32.mrf.mxu0
  %v1298 = vadd.f32 %v1201, %v1297
  %v1299 = vpop.f32.mrf.mxu0
  %v1300 = vpop.f32.mrf.mxu0
  %v1301 = vadd.f32 %v1204, %v1300
  %v1302 = vpop.f32.mrf.mxu0
  %1303 = vmatprep.mubr.bf16.mxu0 %v545
  %1304 = vmatmul.mubr.bf16.gmra.mxu0 %v544
  %v1305 = vpop.f32.mrf.mxu0
  %v1306 = vadd.f32 %v1209, %v1305
  %v1307 = vpop.f32.mrf.mxu0
  %v1308 = vpop.f32.mrf.mxu0
  %v1309 = vadd.f32 %v1212, %v1308
  %v1310 = vpop.f32.mrf.mxu0
  %1311 = vmatprep.mubr.bf16.mxu0 %v555
  %1312 = vmatmul.mubr.bf16.gmra.mxu0 %v554
  %v1313 = vpop.f32.mrf.mxu0
  %v1314 = vadd.f32 %v1217, %v1313
  %v1315 = vpop.f32.mrf.mxu0
  %v1316 = vpop.f32.mrf.mxu0
  %v1317 = vadd.f32 %v1220, %v1316
  %v1318 = vpop.f32.mrf.mxu0
  %1319 = vmatprep.mubr.bf16.mxu0 %v565
  %1320 = vmatmul.mubr.bf16.gmra.mxu0 %v564
  %v1321 = vpop.f32.mrf.mxu0
  %v1322 = vadd.f32 %v1225, %v1321
  %v1323 = vpop.f32.mrf.mxu0
  %v1324 = vpop.f32.mrf.mxu0
  %v1325 = vadd.f32 %v1228, %v1324
  %v1326 = vpop.f32.mrf.mxu0
  %1327 = vmatprep.mubr.bf16.mxu0 %v575
  %1328 = vmatmul.mubr.bf16.gmra.mxu0 %v574
  %v1329 = vpop.f32.mrf.mxu0
  %v1330 = vadd.f32 %v1233, %v1329
  %v1331 = vpop.f32.mrf.mxu0
  %v1332 = vpop.f32.mrf.mxu0
  %v1333 = vadd.f32 %v1236, %v1332
  %v1334 = vpop.f32.mrf.mxu0
  %1335 = vdwg.mxu0
  %1336 = vmatprep.subr.bf16.mxu0 0
  %1337 = vmatpush1.bf16.msra.mxu0 %v1021
  %1338 = vmatprep.subr.bf16.mxu0 0
  %1339 = vmatpush1.bf16.msra.mxu0 %v1020
  %1340 = vmatprep.subr.bf16.mxu0 0
  %1341 = vmatpush1.bf16.msra.mxu0 %v1019
  %1342 = vmatprep.subr.bf16.mxu0 0
  %1343 = vmatpush1.bf16.msra.mxu0 %v1018
  %1344 = vmatprep.subr.bf16.mxu0 0
  %1345 = vmatpush1.bf16.msra.mxu0 %v1017
  %1346 = vmatprep.subr.bf16.mxu0 0
  %1347 = vmatpush1.bf16.msra.mxu0 %v1016
  %1348 = vmatprep.subr.bf16.mxu0 0
  %1349 = vmatpush1.bf16.msra.mxu0 %v1015
  %1350 = vmatprep.subr.bf16.mxu0 0
  %1351 = vmatpush1.bf16.msra.mxu0 %v1014
  %1352 = vmatprep.subr.bf16.mxu0 0
  %1353 = vmatpush2.bf16.msra.mxu0 %v1029
  %1354 = vmatprep.subr.bf16.mxu0 0
  %1355 = vmatpush2.bf16.msra.mxu0 %v1028
  %1356 = vmatprep.subr.bf16.mxu0 0
  %1357 = vmatpush2.bf16.msra.mxu0 %v1027
  %1358 = vmatprep.subr.bf16.mxu0 0
  %1359 = vmatpush2.bf16.msra.mxu0 %v1026
  %1360 = vmatprep.subr.bf16.mxu0 0
  %1361 = vmatpush2.bf16.msra.mxu0 %v1025
  %1362 = vmatprep.subr.bf16.mxu0 0
  %1363 = vmatpush2.bf16.msra.mxu0 %v1024
  %1364 = vmatprep.subr.bf16.mxu0 0
  %1365 = vmatpush2.bf16.msra.mxu0 %v1023
  %1366 = vmatprep.subr.bf16.mxu0 0
  %1367 = vmatpush2.bf16.msra.mxu0 %v1022
  %1368 = vmatprep.mubr.bf16.mxu0 %v507
  %1369 = vmatmul.mubr.bf16.gmra.mxu0 %v506
  %v1370 = vpop.f32.mrf.mxu0
  %v1371 = vadd.f32 %v1274, %v1370
  %v1372 = vpop.f32.mrf.mxu0
  %v1373 = vpop.f32.mrf.mxu0
  %v1374 = vadd.f32 %v1277, %v1373
  %v1375 = vpop.f32.mrf.mxu0
  %1376 = vmatprep.mubr.bf16.mxu0 %v517
  %1377 = vmatmul.mubr.bf16.gmra.mxu0 %v516
  %v1378 = vpop.f32.mrf.mxu0
  %v1379 = vadd.f32 %v1282, %v1378
  %v1380 = vpop.f32.mrf.mxu0
  %v1381 = vpop.f32.mrf.mxu0
  %v1382 = vadd.f32 %v1285, %v1381
  %v1383 = vpop.f32.mrf.mxu0
  %1384 = vmatprep.mubr.bf16.mxu0 %v527
  %1385 = vmatmul.mubr.bf16.gmra.mxu0 %v526
  %v1386 = vpop.f32.mrf.mxu0
  %v1387 = vadd.f32 %v1290, %v1386
  %v1388 = vpop.f32.mrf.mxu0
  %v1389 = vpop.f32.mrf.mxu0
  %v1390 = vadd.f32 %v1293, %v1389
  %v1391 = vpop.f32.mrf.mxu0
  %1392 = vmatprep.mubr.bf16.mxu0 %v537
  %1393 = vmatmul.mubr.bf16.gmra.mxu0 %v536
  %v1394 = vpop.f32.mrf.mxu0
  %v1395 = vadd.f32 %v1298, %v1394
  %v1396 = vpop.f32.mrf.mxu0
  %v1397 = vpop.f32.mrf.mxu0
  %v1398 = vadd.f32 %v1301, %v1397
  %v1399 = vpop.f32.mrf.mxu0
  %1400 = vmatprep.mubr.bf16.mxu0 %v547
  %1401 = vmatmul.mubr.bf16.gmra.mxu0 %v546
  %v1402 = vpop.f32.mrf.mxu0
  %v1403 = vadd.f32 %v1306, %v1402
  %v1404 = vpop.f32.mrf.mxu0
  %v1405 = vpop.f32.mrf.mxu0
  %v1406 = vadd.f32 %v1309, %v1405
  %v1407 = vpop.f32.mrf.mxu0
  %1408 = vmatprep.mubr.bf16.mxu0 %v557
  %1409 = vmatmul.mubr.bf16.gmra.mxu0 %v556
  %v1410 = vpop.f32.mrf.mxu0
  %v1411 = vadd.f32 %v1314, %v1410
  %v1412 = vpop.f32.mrf.mxu0
  %v1413 = vpop.f32.mrf.mxu0
  %v1414 = vadd.f32 %v1317, %v1413
  %v1415 = vpop.f32.mrf.mxu0
  %1416 = vmatprep.mubr.bf16.mxu0 %v567
  %1417 = vmatmul.mubr.bf16.gmra.mxu0 %v566
  %v1418 = vpop.f32.mrf.mxu0
  %v1419 = vadd.f32 %v1322, %v1418
  %v1420 = vpop.f32.mrf.mxu0
  %v1421 = vpop.f32.mrf.mxu0
  %v1422 = vadd.f32 %v1325, %v1421
  %v1423 = vpop.f32.mrf.mxu0
  %1424 = vmatprep.mubr.bf16.mxu0 %v577
  %1425 = vmatmul.mubr.bf16.gmra.mxu0 %v576
  %v1426 = vpop.f32.mrf.mxu0
  %v1427 = vadd.f32 %v1330, %v1426
  %v1428 = vpop.f32.mrf.mxu0
  %v1429 = vpop.f32.mrf.mxu0
  %v1430 = vadd.f32 %v1333, %v1429
  %v1431 = vpop.f32.mrf.mxu0
  %1432 = vdwg.mxu0
  %1433 = vmatprep.subr.bf16.mxu0 0
  %1434 = vmatpush1.bf16.msra.mxu0 %v1037
  %1435 = vmatprep.subr.bf16.mxu0 0
  %1436 = vmatpush1.bf16.msra.mxu0 %v1036
  %1437 = vmatprep.subr.bf16.mxu0 0
  %1438 = vmatpush1.bf16.msra.mxu0 %v1035
  %1439 = vmatprep.subr.bf16.mxu0 0
  %1440 = vmatpush1.bf16.msra.mxu0 %v1034
  %1441 = vmatprep.subr.bf16.mxu0 0
  %1442 = vmatpush1.bf16.msra.mxu0 %v1033
  %1443 = vmatprep.subr.bf16.mxu0 0
  %1444 = vmatpush1.bf16.msra.mxu0 %v1032
  %1445 = vmatprep.subr.bf16.mxu0 0
  %1446 = vmatpush1.bf16.msra.mxu0 %v1031
  %1447 = vmatprep.subr.bf16.mxu0 0
  %1448 = vmatpush1.bf16.msra.mxu0 %v1030
  %1449 = vmatprep.subr.bf16.mxu0 0
  %1450 = vmatpush2.bf16.msra.mxu0 %v1045
  %1451 = vmatprep.subr.bf16.mxu0 0
  %1452 = vmatpush2.bf16.msra.mxu0 %v1044
  %1453 = vmatprep.subr.bf16.mxu0 0
  %1454 = vmatpush2.bf16.msra.mxu0 %v1043
  %1455 = vmatprep.subr.bf16.mxu0 0
  %1456 = vmatpush2.bf16.msra.mxu0 %v1042
  %1457 = vmatprep.subr.bf16.mxu0 0
  %1458 = vmatpush2.bf16.msra.mxu0 %v1041
  %1459 = vmatprep.subr.bf16.mxu0 0
  %1460 = vmatpush2.bf16.msra.mxu0 %v1040
  %1461 = vmatprep.subr.bf16.mxu0 0
  %1462 = vmatpush2.bf16.msra.mxu0 %v1039
  %1463 = vmatprep.subr.bf16.mxu0 0
  %1464 = vmatpush2.bf16.msra.mxu0 %v1038
  %1465 = vmatprep.mubr.bf16.mxu0 %v509
  %1466 = vmatmul.mubr.bf16.gmra.mxu0 %v508
  %v1467 = vpop.f32.mrf.mxu0
  %v1468 = vadd.f32 %v1371, %v1467
  %v1469 = vpop.f32.mrf.mxu0
  %v1470 = vpop.f32.mrf.mxu0
  %v1471 = vadd.f32 %v1374, %v1470
  %v1472 = vpop.f32.mrf.mxu0
  %1473 = vmatprep.mubr.bf16.mxu0 %v519
  %1474 = vmatmul.mubr.bf16.gmra.mxu0 %v518
  %v1475 = vpop.f32.mrf.mxu0
  %v1476 = vadd.f32 %v1379, %v1475
  %v1477 = vpop.f32.mrf.mxu0
  %v1478 = vpop.f32.mrf.mxu0
  %v1479 = vadd.f32 %v1382, %v1478
  %v1480 = vpop.f32.mrf.mxu0
  %1481 = vmatprep.mubr.bf16.mxu0 %v529
  %1482 = vmatmul.mubr.bf16.gmra.mxu0 %v528
  %v1483 = vpop.f32.mrf.mxu0
  %v1484 = vadd.f32 %v1387, %v1483
  %v1485 = vpop.f32.mrf.mxu0
  %v1486 = vpop.f32.mrf.mxu0
  %v1487 = vadd.f32 %v1390, %v1486
  %v1488 = vpop.f32.mrf.mxu0
  %1489 = vmatprep.mubr.bf16.mxu0 %v539
  %1490 = vmatmul.mubr.bf16.gmra.mxu0 %v538
  %v1491 = vpop.f32.mrf.mxu0
  %v1492 = vadd.f32 %v1395, %v1491
  %v1493 = vpop.f32.mrf.mxu0
  %v1494 = vpop.f32.mrf.mxu0
  %v1495 = vadd.f32 %v1398, %v1494
  %v1496 = vpop.f32.mrf.mxu0
  %1497 = vmatprep.mubr.bf16.mxu0 %v549
  %1498 = vmatmul.mubr.bf16.gmra.mxu0 %v548
  %v1499 = vpop.f32.mrf.mxu0
  %v1500 = vadd.f32 %v1403, %v1499
  %v1501 = vpop.f32.mrf.mxu0
  %v1502 = vpop.f32.mrf.mxu0
  %v1503 = vadd.f32 %v1406, %v1502
  %v1504 = vpop.f32.mrf.mxu0
  %1505 = vmatprep.mubr.bf16.mxu0 %v559
  %1506 = vmatmul.mubr.bf16.gmra.mxu0 %v558
  %v1507 = vpop.f32.mrf.mxu0
  %v1508 = vadd.f32 %v1411, %v1507
  %v1509 = vpop.f32.mrf.mxu0
  %v1510 = vpop.f32.mrf.mxu0
  %v1511 = vadd.f32 %v1414, %v1510
  %v1512 = vpop.f32.mrf.mxu0
  %1513 = vmatprep.mubr.bf16.mxu0 %v569
  %1514 = vmatmul.mubr.bf16.gmra.mxu0 %v568
  %v1515 = vpop.f32.mrf.mxu0
  %v1516 = vadd.f32 %v1419, %v1515
  %v1517 = vpop.f32.mrf.mxu0
  %v1518 = vpop.f32.mrf.mxu0
  %v1519 = vadd.f32 %v1422, %v1518
  %v1520 = vpop.f32.mrf.mxu0
  %1521 = vmatprep.mubr.bf16.mxu0 %v579
  %1522 = vmatmul.mubr.bf16.gmra.mxu0 %v578
  %v1523 = vpop.f32.mrf.mxu0
  %v1524 = vadd.f32 %v1427, %v1523
  %v1525 = vpop.f32.mrf.mxu0
  %v1526 = vpop.f32.mrf.mxu0
  %v1527 = vadd.f32 %v1430, %v1526
  %v1528 = vpop.f32.mrf.mxu0
  %1529 = vdwg.mxu0
  %1530 = vmatprep.subr.bf16.mxu0 0
  %1531 = vmatpush1.bf16.msra.mxu0 %v1053
  %1532 = vmatprep.subr.bf16.mxu0 0
  %1533 = vmatpush1.bf16.msra.mxu0 %v1052
  %1534 = vmatprep.subr.bf16.mxu0 0
  %1535 = vmatpush1.bf16.msra.mxu0 %v1051
  %1536 = vmatprep.subr.bf16.mxu0 0
  %1537 = vmatpush1.bf16.msra.mxu0 %v1050
  %1538 = vmatprep.subr.bf16.mxu0 0
  %1539 = vmatpush1.bf16.msra.mxu0 %v1049
  %1540 = vmatprep.subr.bf16.mxu0 0
  %1541 = vmatpush1.bf16.msra.mxu0 %v1048
  %1542 = vmatprep.subr.bf16.mxu0 0
  %1543 = vmatpush1.bf16.msra.mxu0 %v1047
  %1544 = vmatprep.subr.bf16.mxu0 0
  %1545 = vmatpush1.bf16.msra.mxu0 %v1046
  %1546 = vmatprep.subr.bf16.mxu0 0
  %1547 = vmatpush2.bf16.msra.mxu0 %v1061
  %1548 = vmatprep.subr.bf16.mxu0 0
  %1549 = vmatpush2.bf16.msra.mxu0 %v1060
  %1550 = vmatprep.subr.bf16.mxu0 0
  %1551 = vmatpush2.bf16.msra.mxu0 %v1059
  %1552 = vmatprep.subr.bf16.mxu0 0
  %1553 = vmatpush2.bf16.msra.mxu0 %v1058
  %1554 = vmatprep.subr.bf16.mxu0 0
  %1555 = vmatpush2.bf16.msra.mxu0 %v1057
  %1556 = vmatprep.subr.bf16.mxu0 0
  %1557 = vmatpush2.bf16.msra.mxu0 %v1056
  %1558 = vmatprep.subr.bf16.mxu0 0
  %1559 = vmatpush2.bf16.msra.mxu0 %v1055
  %1560 = vmatprep.subr.bf16.mxu0 0
  %1561 = vmatpush2.bf16.msra.mxu0 %v1054
  %1562 = vmatprep.mubr.bf16.mxu0 %v511
  %1563 = vmatmul.mubr.bf16.gmra.mxu0 %v510
  %v1564 = vpop.f32.mrf.mxu0
  %v1565 = vadd.f32 %v1468, %v1564
  %v1566 = vpop.f32.mrf.mxu0
  %v1567 = vpop.f32.mrf.mxu0
  %v1568 = vadd.f32 %v1471, %v1567
  %v1569 = vpop.f32.mrf.mxu0
  %1570 = vmatprep.mubr.bf16.mxu0 %v521
  %1571 = vmatmul.mubr.bf16.gmra.mxu0 %v520
  %v1572 = vpop.f32.mrf.mxu0
  %v1573 = vadd.f32 %v1476, %v1572
  %v1574 = vpop.f32.mrf.mxu0
  %v1575 = vpop.f32.mrf.mxu0
  %v1576 = vadd.f32 %v1479, %v1575
  %v1577 = vpop.f32.mrf.mxu0
  %1578 = vmatprep.mubr.bf16.mxu0 %v531
  %1579 = vmatmul.mubr.bf16.gmra.mxu0 %v530
  %v1580 = vpop.f32.mrf.mxu0
  %v1581 = vadd.f32 %v1484, %v1580
  %v1582 = vpop.f32.mrf.mxu0
  %v1583 = vpop.f32.mrf.mxu0
  %v1584 = vadd.f32 %v1487, %v1583
  %v1585 = vpop.f32.mrf.mxu0
  %1586 = vmatprep.mubr.bf16.mxu0 %v541
  %1587 = vmatmul.mubr.bf16.gmra.mxu0 %v540
  %v1588 = vpop.f32.mrf.mxu0
  %v1589 = vadd.f32 %v1492, %v1588
  %v1590 = vpop.f32.mrf.mxu0
  %v1591 = vpop.f32.mrf.mxu0
  %v1592 = vadd.f32 %v1495, %v1591
  %v1593 = vpop.f32.mrf.mxu0
  %1594 = vmatprep.mubr.bf16.mxu0 %v551
  %1595 = vmatmul.mubr.bf16.gmra.mxu0 %v550
  %v1596 = vpop.f32.mrf.mxu0
  %v1597 = vadd.f32 %v1500, %v1596
  %v1598 = vpop.f32.mrf.mxu0
  %v1599 = vpop.f32.mrf.mxu0
  %v1600 = vadd.f32 %v1503, %v1599
  %v1601 = vpop.f32.mrf.mxu0
  %1602 = vmatprep.mubr.bf16.mxu0 %v561
  %1603 = vmatmul.mubr.bf16.gmra.mxu0 %v560
  %v1604 = vpop.f32.mrf.mxu0
  %v1605 = vadd.f32 %v1508, %v1604
  %v1606 = vpop.f32.mrf.mxu0
  %v1607 = vpop.f32.mrf.mxu0
  %v1608 = vadd.f32 %v1511, %v1607
  %v1609 = vpop.f32.mrf.mxu0
  %1610 = vmatprep.mubr.bf16.mxu0 %v571
  %1611 = vmatmul.mubr.bf16.gmra.mxu0 %v570
  %v1612 = vpop.f32.mrf.mxu0
  %v1613 = vadd.f32 %v1516, %v1612
  %v1614 = vpop.f32.mrf.mxu0
  %v1615 = vpop.f32.mrf.mxu0
  %v1616 = vadd.f32 %v1519, %v1615
  %v1617 = vpop.f32.mrf.mxu0
  %1618 = vmatprep.mubr.bf16.mxu0 %v581
  %1619 = vmatmul.mubr.bf16.gmra.mxu0 %v580
  %v1620 = vpop.f32.mrf.mxu0
  %v1621 = vadd.f32 %v1524, %v1620
  %v1622 = vpop.f32.mrf.mxu0
  %v1623 = vpop.f32.mrf.mxu0
  %v1624 = vadd.f32 %v1527, %v1623
  %v1625 = vpop.f32.mrf.mxu0
  %1626 = vdwg.mxu0
  %v1627 = vmax.f32 %v1565, 0.0
  %v1628 = vmax.f32 %v1568, 0.0
  %v1629 = vmax.f32 %v1573, 0.0
  %v1630 = vmax.f32 %v1576, 0.0
  %v1631 = vmax.f32 %v1581, 0.0
  %v1632 = vmax.f32 %v1584, 0.0
  %v1633 = vmax.f32 %v1589, 0.0
  %v1634 = vmax.f32 %v1592, 0.0
  %v1635 = vmax.f32 %v1597, 0.0
  %v1636 = vmax.f32 %v1600, 0.0
  %v1637 = vmax.f32 %v1605, 0.0
  %v1638 = vmax.f32 %v1608, 0.0
  %v1639 = vmax.f32 %v1613, 0.0
  %v1640 = vmax.f32 %v1616, 0.0
  %v1641 = vmax.f32 %v1621, 0.0
  %v1642 = vmax.f32 %v1624, 0.0
  %1643 = vst [vmem:[%s3] sm:$0xff] %v1627
  %1644 = vst [vmem:[%s3 + $0x8] sm:$0xff] %v1628
  %1645 = vst [vmem:[%s3 + $0x10] sm:$0xff] %v1629
  %1646 = vst [vmem:[%s3 + $0x18] sm:$0xff] %v1630
  %1647 = vst [vmem:[%s3 + $0x20] sm:$0xff] %v1631
  %1648 = vst [vmem:[%s3 + $0x28] sm:$0xff] %v1632
  %1649 = vst [vmem:[%s3 + $0x30] sm:$0xff] %v1633
  %1650 = vst [vmem:[%s3 + $0x38] sm:$0xff] %v1634
  %1651 = vst [vmem:[%s3 + $0x40] sm:$0xff] %v1635
  %1652 = vst [vmem:[%s3 + $0x48] sm:$0xff] %v1636
  %1653 = vst [vmem:[%s3 + $0x50] sm:$0xff] %v1637
  %1654 = vst [vmem:[%s3 + $0x58] sm:$0xff] %v1638
  %1655 = vst [vmem:[%s3 + $0x60] sm:$0xff] %v1639
  %1656 = vst [vmem:[%s3 + $0x68] sm:$0xff] %v1640
  %1657 = vst [vmem:[%s3 + $0x70] sm:$0xff] %v1641
  %1658 = vst [vmem:[%s3 + $0x78] sm:$0xff] %v1642
  // Predicated region
  $region14: #{basic_block_forward.3} parent=0 // pred_check
    _
  $region15: #{basic_block_forward.3} parent=0 // pred_check_branch
    %1660 = sbr.rel (0) target = $region17
  $region16: #{basic_block_forward.3} parent=0 // pred_region
    _
  $region17: #{basic_block_forward.3} parent=0 // pred_fallthru
    _
  // Predicated region
  $region18: #{basic_block_forward.3} parent=0 // pred_check
    _
  $region19: #{basic_block_forward.3} parent=0 // pred_check_branch
    %1662 = sbr.rel (0) target = $region21
  $region20: #{basic_block_forward.3} parent=0 // pred_region
    _
  $region21: #{basic_block_forward.3} parent=0 // pred_fallthru
    _

</llo_original>
